<compile_context>
chip_gen: v5e
topology: v5e:2x2
jax: 0.10.0
libtpu: 0.0.40
codegen_flags: <defaults>
</compile_context>

<pallas_src>
import math

import jax
import jax.numpy as jnp
from jax.experimental import pallas as pl
from jax.experimental.pallas import tpu as pltpu


COMPUTE_DTYPE = jnp.bfloat16  # MXU-native operand dtype; accumulation is f32.


def attention_gate_kernel(q_ref, k_ref, v_ref,
                          wq_ref, bq_ref, wk_ref, bk_ref, wv_ref, bv_ref,
                          o_ref):
    Bb, S, H = q_ref.shape

    # Pack the batch block into the row dim so the projection LHS has Bb*S
    # rows (256 for Bb=2, S=128) — full-width operand for the 256x256 MXU.
    # Merging the leading dims keeps the (8,128) minor tiling -> no relayout.
    q_in = q_ref[...].reshape(Bb * S, H).astype(COMPUTE_DTYPE)
    k_in = k_ref[...].reshape(Bb * S, H).astype(COMPUTE_DTYPE)
    v_in = v_ref[...].reshape(Bb * S, H).astype(COMPUTE_DTYPE)

    # --- linear projections: bf16 operands, f32 accumulation on the MXU ---
    # (the 1/sqrt(H) attention scale is pre-folded into wq/bq by the wrapper)
    q = jnp.dot(q_in, wq_ref[...], preferred_element_type=jnp.float32) + bq_ref[...]
    k = jnp.dot(k_in, wk_ref[...], preferred_element_type=jnp.float32) + bk_ref[...]
    v = jnp.dot(v_in, wv_ref[...], preferred_element_type=jnp.float32) + bv_ref[...]

    qb = q.reshape(Bb, S, H).astype(COMPUTE_DTYPE)
    kb = k.reshape(Bb, S, H).astype(COMPUTE_DTYPE)
    vb = v.reshape(Bb, S, H).astype(COMPUTE_DTYPE)

    # --- scaled dot-product attention ---
    # Contract the last dims of Q and K directly (no explicit K transpose).
    s = jnp.einsum("bqd,bkd->bqk", qb, kb,
                   preferred_element_type=jnp.float32)            # (Bb, S, S) f32

    # Numerically stable softmax; normalization via an EUP reciprocal folded
    # into the output instead of an (S, S) full-precision divide.
    m = jnp.max(s, axis=-1, keepdims=True)
    e = jnp.exp(s - m)
    inv = pl.reciprocal(jnp.sum(e, axis=-1, keepdims=True), approx=True)

    out = jnp.einsum("bqk,bkd->bqd", e.astype(COMPUTE_DTYPE), vb,
                     preferred_element_type=jnp.float32) * inv     # (Bb, S, H)

    o_ref[...] = out.astype(o_ref.dtype)


def _pick_batch_block(batch):
    # Pack 2 batch elements per grid step when possible (256-row projection
    # LHS); keeps the grid length even for v7x's two TensorCores when B > 2
    # and collapses a tiny batch (B == 2) into one step.
    return 2 if batch % 2 == 0 else 1


def attention_gate_forward(query, key, value, params):
    """query/key/value: (B, S, H). Returns the attention output (B, S, H)."""
    B, S, H = query.shape
    assert S % 8 == 0 and (H % 128 == 0), "S must be 8-aligned, H 128-aligned"
    Bb = _pick_batch_block(B)
    scale = 1.0 / math.sqrt(H)

    # One-time parameter prep (would be pre-folded at load time in practice):
    # fold the attention scale into wq/bq; cast weights to bf16 (halves weight
    # HBM traffic and VMEM); biases stay f32 and add into the f32 accumulator.
    wq = (params["wq"] * scale).astype(COMPUTE_DTYPE)
    bq = (params["bq"] * scale).astype(jnp.float32)
    wk = params["wk"].astype(COMPUTE_DTYPE)
    bk = params["bk"].astype(jnp.float32)
    wv = params["wv"].astype(COMPUTE_DTYPE)
    bv = params["bv"].astype(jnp.float32)

    seq_spec = pl.BlockSpec((Bb, S, H), lambda b: (b, 0, 0))

    def replicated_spec(shape):
        n = len(shape)
        # Constant index_map -> single-buffer; double-buffering an invariant
        # weight tile is pure VMEM waste (matters at BERT-scale H).
        return pl.BlockSpec(shape, lambda b, _n=n: (0,) * _n,
                            pipeline_mode=pl.Buffered(1))

    return pl.pallas_call(
        attention_gate_kernel,
        out_shape=jax.ShapeDtypeStruct((B, S, H), query.dtype),
        grid=(B // Bb,),
        in_specs=[
            seq_spec, seq_spec, seq_spec,
            replicated_spec(wq.shape), replicated_spec(bq.shape),
            replicated_spec(wk.shape), replicated_spec(bk.shape),
            replicated_spec(wv.shape), replicated_spec(bv.shape),
        ],
        out_specs=pl.BlockSpec((Bb, S, H), lambda b: (b, 0, 0)),
        compiler_params=pltpu.CompilerParams(
            dimension_semantics=("parallel",),
            vmem_limit_bytes=32 * 1024 * 1024),
    )(query, key, value, wq, bq, wk, bk, wv, bv)


def attention_gate_reference(query, key, value, params):
    """Pure-JAX f32 reference mirroring the PyTorch forward."""
    q = query @ params["wq"] + params["bq"]
    k = key @ params["wk"] + params["bk"]
    v = value @ params["wv"] + params["bv"]
    scale = 1.0 / math.sqrt(query.shape[-1])
    s = jnp.einsum("bqh,bkh->bqk", q, k) * scale
    p = jax.nn.softmax(s, axis=-1)
    return jnp.einsum("bqk,bkh->bqh", p, v)


if __name__ == "__main__":
    # Small shapes consistent with the module; 128 keeps tiles (8,128)-aligned.
    B, S, H = 2, 128, 128

    root = jax.random.PRNGKey(0)
    ks = jax.random.split(root, 9)
    wscale = 0.02

    query = jax.random.normal(ks[0], (B, S, H), dtype=jnp.float32)
    key_in = jax.random.normal(ks[1], (B, S, H), dtype=jnp.float32)
    value = jax.random.normal(ks[2], (B, S, H), dtype=jnp.float32)

    # Linear weights stored already-transposed as (in, out); biases as (1, out).
    params = {
        "wq": jax.random.normal(ks[3], (H, H), dtype=jnp.float32) * wscale,
        "bq": jax.random.normal(ks[4], (1, H), dtype=jnp.float32) * wscale,
        "wk": jax.random.normal(ks[5], (H, H), dtype=jnp.float32) * wscale,
        "bk": jax.random.normal(ks[6], (1, H), dtype=jnp.float32) * wscale,
        "wv": jax.random.normal(ks[7], (H, H), dtype=jnp.float32) * wscale,
        "bv": jax.random.normal(ks[8], (1, H), dtype=jnp.float32) * wscale,
    }

    out = attention_gate_forward(query, key_in, value, params)
    out = jax.block_until_ready(out)

    ref = attention_gate_reference(query, key_in, value, params)
    assert out.shape == (B, S, H)
    # Tolerance loosened vs the f32 reference because the kernel computes the
    # matmuls with bf16 operands (f32 accumulation).
    assert jnp.allclose(out, ref, rtol=5e-2, atol=5e-3), "mismatch vs reference"

    print("KERNEL_OK")
</pallas_src>

<mosaic_0001>
module attributes {stable_mosaic.version = 11 : i64} {
  func.func @attention_gate_kernel(%arg0: i32, %arg1: memref<2x128x128xf32, #tpu.memory_space<vmem>>, %arg2: memref<2x128x128xf32, #tpu.memory_space<vmem>>, %arg3: memref<2x128x128xf32, #tpu.memory_space<vmem>>, %arg4: memref<128x128xbf16, #tpu.memory_space<vmem>>, %arg5: memref<1x128xf32, #tpu.memory_space<vmem>>, %arg6: memref<128x128xbf16, #tpu.memory_space<vmem>>, %arg7: memref<1x128xf32, #tpu.memory_space<vmem>>, %arg8: memref<128x128xbf16, #tpu.memory_space<vmem>>, %arg9: memref<1x128xf32, #tpu.memory_space<vmem>>, %arg10: memref<2x128x128xf32, #tpu.memory_space<vmem>>) attributes {dimension_semantics = [#tpu.dimension_semantics<parallel>], iteration_bounds = array<i64: 1>, scalar_prefetch = 0 : i64, scratch_operands = 0 : i64, tpu.core_type = #tpu.core_type<tc>, window_params = [{transform_indices = @transform_0, window_bounds = array<i64: 2, 128, 128>}, {transform_indices = @transform_1, window_bounds = array<i64: 2, 128, 128>}, {transform_indices = @transform_2, window_bounds = array<i64: 2, 128, 128>}, {pipeline_mode = #tpu.pipeline_mode<synchronous>, transform_indices = @transform_3, window_bounds = array<i64: 128, 128>}, {pipeline_mode = #tpu.pipeline_mode<synchronous>, transform_indices = @transform_4, window_bounds = array<i64: 1, 128>}, {pipeline_mode = #tpu.pipeline_mode<synchronous>, transform_indices = @transform_5, window_bounds = array<i64: 128, 128>}, {pipeline_mode = #tpu.pipeline_mode<synchronous>, transform_indices = @transform_6, window_bounds = array<i64: 1, 128>}, {pipeline_mode = #tpu.pipeline_mode<synchronous>, transform_indices = @transform_7, window_bounds = array<i64: 128, 128>}, {pipeline_mode = #tpu.pipeline_mode<synchronous>, transform_indices = @transform_8, window_bounds = array<i64: 1, 128>}, {transform_indices = @transform_9, window_bounds = array<i64: 2, 128, 128>}]} {
    %c0 = arith.constant 0 : index
    %c0_0 = arith.constant 0 : index
    %c0_1 = arith.constant 0 : index
    %0 = vector.load %arg1[%c0, %c0_0, %c0_1] : memref<2x128x128xf32, #tpu.memory_space<vmem>>, vector<2x128x128xf32>
    %1 = vector.shape_cast %0 : vector<2x128x128xf32> to vector<256x128xf32>
    %2 = arith.truncf %1 : vector<256x128xf32> to vector<256x128xbf16>
    %c0_2 = arith.constant 0 : index
    %c0_3 = arith.constant 0 : index
    %c0_4 = arith.constant 0 : index
    %3 = vector.load %arg2[%c0_2, %c0_3, %c0_4] : memref<2x128x128xf32, #tpu.memory_space<vmem>>, vector<2x128x128xf32>
    %4 = vector.shape_cast %3 : vector<2x128x128xf32> to vector<256x128xf32>
    %5 = arith.truncf %4 : vector<256x128xf32> to vector<256x128xbf16>
    %c0_5 = arith.constant 0 : index
    %c0_6 = arith.constant 0 : index
    %c0_7 = arith.constant 0 : index
    %6 = vector.load %arg3[%c0_5, %c0_6, %c0_7] : memref<2x128x128xf32, #tpu.memory_space<vmem>>, vector<2x128x128xf32>
    %7 = vector.shape_cast %6 : vector<2x128x128xf32> to vector<256x128xf32>
    %8 = arith.truncf %7 : vector<256x128xf32> to vector<256x128xbf16>
    %c0_8 = arith.constant 0 : index
    %c0_9 = arith.constant 0 : index
    %9 = vector.load %arg4[%c0_8, %c0_9] : memref<128x128xbf16, #tpu.memory_space<vmem>>, vector<128x128xbf16>
    %cst = arith.constant dense<0.000000e+00> : vector<256x128xf32>
    %10 = tpu.matmul %2, %9, %cst {dimension_numbers = #tpu.dot_dimension_numbers<[1], [0], [0], [1], [0, 0, 1, 1], [], []>} : vector<256x128xbf16>, vector<128x128xbf16>, vector<256x128xf32> -> vector<256x128xf32>
    %c0_10 = arith.constant 0 : index
    %c0_11 = arith.constant 0 : index
    %11 = vector.load %arg5[%c0_10, %c0_11] : memref<1x128xf32, #tpu.memory_space<vmem>>, vector<1x128xf32>
    %12 = vector.broadcast %11 : vector<1x128xf32> to vector<256x128xf32>
    %13 = arith.addf %10, %12 : vector<256x128xf32>
    %c0_12 = arith.constant 0 : index
    %c0_13 = arith.constant 0 : index
    %14 = vector.load %arg6[%c0_12, %c0_13] : memref<128x128xbf16, #tpu.memory_space<vmem>>, vector<128x128xbf16>
    %cst_14 = arith.constant dense<0.000000e+00> : vector<256x128xf32>
    %15 = tpu.matmul %5, %14, %cst_14 {dimension_numbers = #tpu.dot_dimension_numbers<[1], [0], [0], [1], [0, 0, 1, 1], [], []>} : vector<256x128xbf16>, vector<128x128xbf16>, vector<256x128xf32> -> vector<256x128xf32>
    %c0_15 = arith.constant 0 : index
    %c0_16 = arith.constant 0 : index
    %16 = vector.load %arg7[%c0_15, %c0_16] : memref<1x128xf32, #tpu.memory_space<vmem>>, vector<1x128xf32>
    %17 = vector.broadcast %16 : vector<1x128xf32> to vector<256x128xf32>
    %18 = arith.addf %15, %17 : vector<256x128xf32>
    %c0_17 = arith.constant 0 : index
    %c0_18 = arith.constant 0 : index
    %19 = vector.load %arg8[%c0_17, %c0_18] : memref<128x128xbf16, #tpu.memory_space<vmem>>, vector<128x128xbf16>
    %cst_19 = arith.constant dense<0.000000e+00> : vector<256x128xf32>
    %20 = tpu.matmul %8, %19, %cst_19 {dimension_numbers = #tpu.dot_dimension_numbers<[1], [0], [0], [1], [0, 0, 1, 1], [], []>} : vector<256x128xbf16>, vector<128x128xbf16>, vector<256x128xf32> -> vector<256x128xf32>
    %c0_20 = arith.constant 0 : index
    %c0_21 = arith.constant 0 : index
    %21 = vector.load %arg9[%c0_20, %c0_21] : memref<1x128xf32, #tpu.memory_space<vmem>>, vector<1x128xf32>
    %22 = vector.broadcast %21 : vector<1x128xf32> to vector<256x128xf32>
    %23 = arith.addf %20, %22 : vector<256x128xf32>
    %24 = vector.shape_cast %13 : vector<256x128xf32> to vector<2x128x128xf32>
    %25 = arith.truncf %24 : vector<2x128x128xf32> to vector<2x128x128xbf16>
    %26 = vector.shape_cast %18 : vector<256x128xf32> to vector<2x128x128xf32>
    %27 = arith.truncf %26 : vector<2x128x128xf32> to vector<2x128x128xbf16>
    %28 = vector.shape_cast %23 : vector<256x128xf32> to vector<2x128x128xf32>
    %29 = arith.truncf %28 : vector<2x128x128xf32> to vector<2x128x128xbf16>
    "tpu.trace_start"() <{level = 10 : i32, message = "bqd,bkd->bqk"}> : () -> ()
    %cst_22 = arith.constant dense<0.000000e+00> : vector<2x128x128xf32>
    %30 = tpu.matmul %25, %27, %cst_22 {dimension_numbers = #tpu.dot_dimension_numbers<[2], [2], [1], [1], [0, 0, 0, 1, 1, 1], [0], [0]>} : vector<2x128x128xbf16>, vector<2x128x128xbf16>, vector<2x128x128xf32> -> vector<2x128x128xf32>
    "tpu.trace_stop"() : () -> ()
    %cst_23 = arith.constant dense<0xFF800000> : vector<2x128xf32>
    %31 = vector.multi_reduction <maximumf>, %30, %cst_23 [2] : vector<2x128x128xf32> to vector<2x128xf32>
    %32 = vector.shape_cast %31 : vector<2x128xf32> to vector<2x128x1xf32>
    %33 = vector.broadcast %32 : vector<2x128x1xf32> to vector<2x128x128xf32>
    %34 = arith.subf %30, %33 : vector<2x128x128xf32>
    %35 = math.exp %34 : vector<2x128x128xf32>
    %cst_24 = arith.constant dense<0.000000e+00> : vector<2x128xf32>
    %36 = vector.multi_reduction <add>, %35, %cst_24 [2] : vector<2x128x128xf32> to vector<2x128xf32>
    %37 = vector.shape_cast %36 : vector<2x128xf32> to vector<2x128x1xf32>
    %38 = tpu.reciprocal %37 {approx = true} : vector<2x128x1xf32> -> vector<2x128x1xf32>
    %39 = arith.truncf %35 : vector<2x128x128xf32> to vector<2x128x128xbf16>
    "tpu.trace_start"() <{level = 10 : i32, message = "bqk,bkd->bqd"}> : () -> ()
    %cst_25 = arith.constant dense<0.000000e+00> : vector<2x128x128xf32>
    %40 = tpu.matmul %39, %29, %cst_25 {dimension_numbers = #tpu.dot_dimension_numbers<[2], [1], [1], [2], [0, 0, 0, 1, 1, 2], [0], [0]>} : vector<2x128x128xbf16>, vector<2x128x128xbf16>, vector<2x128x128xf32> -> vector<2x128x128xf32>
    "tpu.trace_stop"() : () -> ()
    %41 = vector.broadcast %38 : vector<2x128x1xf32> to vector<2x128x128xf32>
    %42 = arith.mulf %40, %41 : vector<2x128x128xf32>
    %c0_26 = arith.constant 0 : index
    %c0_27 = arith.constant 0 : index
    %c0_28 = arith.constant 0 : index
    %43 = vector.load %arg10[%c0_26, %c0_27, %c0_28] : memref<2x128x128xf32, #tpu.memory_space<vmem>>, vector<2x128x128xf32>
    tpu.vector_store %arg10[%c0_26, %c0_27, %c0_28], %42 {strides = array<i32>} : memref<2x128x128xf32, #tpu.memory_space<vmem>>, vector<2x128x128xf32>,
    return
  }
  func.func @transform_0(%arg0: i32) -> (i32, i32, i32) {
    %c0_i32 = arith.constant 0 : i32
    %c0_i32_0 = arith.constant 0 : i32
    %c0_i32_1 = arith.constant 0 : i32
    return %arg0, %c0_i32, %c0_i32_0 : i32, i32, i32
  }
  func.func @transform_1(%arg0: i32) -> (i32, i32, i32) {
    %c0_i32 = arith.constant 0 : i32
    %c0_i32_0 = arith.constant 0 : i32
    %c0_i32_1 = arith.constant 0 : i32
    return %arg0, %c0_i32, %c0_i32_0 : i32, i32, i32
  }
  func.func @transform_2(%arg0: i32) -> (i32, i32, i32) {
    %c0_i32 = arith.constant 0 : i32
    %c0_i32_0 = arith.constant 0 : i32
    %c0_i32_1 = arith.constant 0 : i32
    return %arg0, %c0_i32, %c0_i32_0 : i32, i32, i32
  }
  func.func @transform_3(%arg0: i32) -> (i32, i32) {
    %c0_i32 = arith.constant 0 : i32
    %c0_i32_0 = arith.constant 0 : i32
    %c0_i32_1 = arith.constant 0 : i32
    return %c0_i32, %c0_i32_0 : i32, i32
  }
  func.func @transform_4(%arg0: i32) -> (i32, i32) {
    %c0_i32 = arith.constant 0 : i32
    %c0_i32_0 = arith.constant 0 : i32
    %c0_i32_1 = arith.constant 0 : i32
    return %c0_i32, %c0_i32_0 : i32, i32
  }
  func.func @transform_5(%arg0: i32) -> (i32, i32) {
    %c0_i32 = arith.constant 0 : i32
    %c0_i32_0 = arith.constant 0 : i32
    %c0_i32_1 = arith.constant 0 : i32
    return %c0_i32, %c0_i32_0 : i32, i32
  }
  func.func @transform_6(%arg0: i32) -> (i32, i32) {
    %c0_i32 = arith.constant 0 : i32
    %c0_i32_0 = arith.constant 0 : i32
    %c0_i32_1 = arith.constant 0 : i32
    return %c0_i32, %c0_i32_0 : i32, i32
  }
  func.func @transform_7(%arg0: i32) -> (i32, i32) {
    %c0_i32 = arith.constant 0 : i32
    %c0_i32_0 = arith.constant 0 : i32
    %c0_i32_1 = arith.constant 0 : i32
    return %c0_i32, %c0_i32_0 : i32, i32
  }
  func.func @transform_8(%arg0: i32) -> (i32, i32) {
    %c0_i32 = arith.constant 0 : i32
    %c0_i32_0 = arith.constant 0 : i32
    %c0_i32_1 = arith.constant 0 : i32
    return %c0_i32, %c0_i32_0 : i32, i32
  }
  func.func @transform_9(%arg0: i32) -> (i32, i32, i32) {
    %c0_i32 = arith.constant 0 : i32
    %c0_i32_0 = arith.constant 0 : i32
    %c0_i32_1 = arith.constant 0 : i32
    return %arg0, %c0_i32, %c0_i32_0 : i32, i32, i32
  }
}

</mosaic_0001>

<llo_original>
// kernel: tpu_custom_call.1
$region0: #{tpu_custom_call.1}
  #allocation0 [shape = 'u32[]', space=smem, size = 0x4, offset = 0x4, fixed_abs, tag = 'smem constant byte address 0x4 - core index']
  #allocation1 [shape = 'u32[72,128]{1,0:T(1,128)}', space=vmem, size = 0x9000, scoped, tag = 'internal scratch']
  %s0 = inlined_call_operand.hbm [shape: f32[2,128,128], index: 0, kind: input, shape index: {}]
  %s1 = inlined_call_operand.hbm [shape: f32[2,128,128], index: 1, kind: input, shape index: {}]
  %s2 = inlined_call_operand.hbm [shape: f32[2,128,128], index: 2, kind: input, shape index: {}]
  %s3 = inlined_call_operand.hbm [shape: bf16[128,128], index: 3, kind: input, shape index: {}]
  %s4 = inlined_call_operand.vmem [shape: f32[1,128], index: 4, kind: input, shape index: {}]
  %s5 = inlined_call_operand.hbm [shape: bf16[128,128], index: 5, kind: input, shape index: {}]
  %s6 = inlined_call_operand.vmem [shape: f32[1,128], index: 6, kind: input, shape index: {}]
  %s7 = inlined_call_operand.hbm [shape: bf16[128,128], index: 7, kind: input, shape index: {}]
  %s8 = inlined_call_operand.vmem [shape: f32[1,128], index: 8, kind: input, shape index: {}]
  %s9 = inlined_call_operand.hbm [shape: f32[2,128,128], index: 9, kind: output, shape index: {}]
  %s10 = sld [smem:[#allocation0]]
  $region70: #{tpu_custom_call.1} parent=0
    _
  %s12 = ssub.s32 1, %s10
  %s13 = scalar_select 0, %s12, %s10
  $region1: #{tpu_custom_call.1} parent=0
    #allocation2 [shape = 'u8[131072]{0}', space=vmem, size = 0x20000, scoped, tag = 'input window, operand 0, single buffered']
    #allocation3 [shape = 's32[1]{0}', space=sflag, size = 0x4, scoped, tag = 'scoped memory for tpu_custom_call.1']
    #allocation4 [shape = 's32[1]{0}', space=sflag, size = 0x4, scoped, tag = 'scoped memory for tpu_custom_call.1']
    #allocation5 [shape = 'u8[131072]{0}', space=vmem, size = 0x20000, scoped, tag = 'input window, operand 1, single buffered']
    #allocation6 [shape = 's32[1]{0}', space=sflag, size = 0x4, scoped, tag = 'scoped memory for tpu_custom_call.1']
    #allocation7 [shape = 'u8[131072]{0}', space=vmem, size = 0x20000, scoped, tag = 'input window, operand 2, single buffered']
    #allocation8 [shape = 'u8[32768]{0}', space=vmem, size = 0x8000, scoped, tag = 'input window, operand 3, single buffered']
    #allocation9 [shape = 's32[1]{0}', space=sflag, size = 0x4, scoped, tag = 'scoped memory for tpu_custom_call.1']
    #allocation10 [shape = 'u8[32768]{0}', space=vmem, size = 0x8000, scoped, tag = 'input window, operand 5, single buffered']
    #allocation11 [shape = 'u8[32768]{0}', space=vmem, size = 0x8000, scoped, tag = 'input window, operand 7, single buffered']
    #allocation12 [shape = 's32[1]{0}', space=sflag, size = 0x4, scoped, tag = 'scoped memory for tpu_custom_call.1']
    #allocation13 [shape = 'u8[131072]{0}', space=vmem, size = 0x20000, scoped, tag = 'output window, operand 0, single buffered']
    %14 = vsyncpa [#allocation3], 0
    %15 = vsyncpa [#allocation6], 0
    %16 = vsyncpa [#allocation9], 0
    %17 = vsyncpa [#allocation12], 0
    %18 = vsyncpa [#allocation4], 0
    // Predicated region
    $region2: #{tpu_custom_call.1} parent=1 // pred_check
      _
    $region3: #{tpu_custom_call.1} parent=1 // pred_check_branch
      %20 = sbr.rel (0) target = $region5
    $region4: #{tpu_custom_call.1} parent=1 // pred_region
      %22 = vsyncadd [#allocation3], 0
      %s23 = sshll.u32 %s0, 4
      %s24 = int_to_ptr.hbm [resolvable:$true] %s23
      %s25 = sshll.u32 [#allocation2], 4
      %s26 = int_to_ptr.vmem [resolvable:$true] %s25
      %31 = dma.hbm_to_vmem [thread:$0]  %s24, 4096, %s26, [#allocation3], 128, 128, 8
    $region5: #{tpu_custom_call.1} parent=1 // pred_fallthru
      _
    // Predicated region
    $region6: #{tpu_custom_call.1} parent=1 // pred_check
      _
    $region7: #{tpu_custom_call.1} parent=1 // pred_check_branch
      %33 = sbr.rel (0) target = $region9
    $region8: #{tpu_custom_call.1} parent=1 // pred_region
      %35 = vsyncadd [#allocation6], 0
      %s36 = sshll.u32 %s1, 4
      %s37 = int_to_ptr.hbm [resolvable:$true] %s36
      %s38 = sshll.u32 [#allocation5], 4
      %s39 = int_to_ptr.vmem [resolvable:$true] %s38
      %44 = dma.hbm_to_vmem [thread:$0]  %s37, 4096, %s39, [#allocation6], 128, 128, 8
    $region9: #{tpu_custom_call.1} parent=1 // pred_fallthru
      _
    // Predicated region
    $region10: #{tpu_custom_call.1} parent=1 // pred_check
      _
    $region11: #{tpu_custom_call.1} parent=1 // pred_check_branch
      %46 = sbr.rel (0) target = $region13
    $region12: #{tpu_custom_call.1} parent=1 // pred_region
      %48 = vsyncadd [#allocation6], 0
      %s49 = sshll.u32 %s2, 4
      %s50 = int_to_ptr.hbm [resolvable:$true] %s49
      %s51 = sshll.u32 [#allocation7], 4
      %s52 = int_to_ptr.vmem [resolvable:$true] %s51
      %57 = dma.hbm_to_vmem [thread:$0]  %s50, 4096, %s52, [#allocation6], 128, 128, 8
    $region13: #{tpu_custom_call.1} parent=1 // pred_fallthru
      _
    // Predicated region
    $region14: #{tpu_custom_call.1} parent=1 // pred_check
      _
    $region15: #{tpu_custom_call.1} parent=1 // pred_check_branch
      %59 = sbr.rel (0) target = $region17
    $region16: #{tpu_custom_call.1} parent=1 // pred_region
      %61 = vsyncadd [#allocation9], 0
      %s62 = sshll.u32 %s3, 4
      %s63 = int_to_ptr.hbm [resolvable:$true] %s62
      %s64 = sshll.u32 [#allocation8], 4
      %s65 = int_to_ptr.vmem [resolvable:$true] %s64
      %70 = dma.hbm_to_vmem [thread:$0]  %s63, 1024, %s65, [#allocation9], 64, 64, 4
    $region17: #{tpu_custom_call.1} parent=1 // pred_fallthru
      _
    // Predicated region
    $region18: #{tpu_custom_call.1} parent=1 // pred_check
      _
    $region19: #{tpu_custom_call.1} parent=1 // pred_check_branch
      %72 = sbr.rel (0) target = $region21
    $region20: #{tpu_custom_call.1} parent=1 // pred_region
      _
    $region21: #{tpu_custom_call.1} parent=1 // pred_fallthru
      _
    // Predicated region
    $region22: #{tpu_custom_call.1} parent=1 // pred_check
      _
    $region23: #{tpu_custom_call.1} parent=1 // pred_check_branch
      %74 = sbr.rel (0) target = $region25
    $region24: #{tpu_custom_call.1} parent=1 // pred_region
      %76 = vsyncadd [#allocation9], 0
      %s77 = sshll.u32 %s5, 4
      %s78 = int_to_ptr.hbm [resolvable:$true] %s77
      %s79 = sshll.u32 [#allocation10], 4
      %s80 = int_to_ptr.vmem [resolvable:$true] %s79
      %85 = dma.hbm_to_vmem [thread:$0]  %s78, 1024, %s80, [#allocation9], 64, 64, 4
    $region25: #{tpu_custom_call.1} parent=1 // pred_fallthru
      _
    // Predicated region
    $region26: #{tpu_custom_call.1} parent=1 // pred_check
      _
    $region27: #{tpu_custom_call.1} parent=1 // pred_check_branch
      %87 = sbr.rel (0) target = $region29
    $region28: #{tpu_custom_call.1} parent=1 // pred_region
      _
    $region29: #{tpu_custom_call.1} parent=1 // pred_fallthru
      _
    // Predicated region
    $region30: #{tpu_custom_call.1} parent=1 // pred_check
      _
    $region31: #{tpu_custom_call.1} parent=1 // pred_check_branch
      %89 = sbr.rel (0) target = $region33
    $region32: #{tpu_custom_call.1} parent=1 // pred_region
      %91 = vsyncadd [#allocation12], 0
      %s92 = sshll.u32 %s7, 4
      %s93 = int_to_ptr.hbm [resolvable:$true] %s92
      %s94 = sshll.u32 [#allocation11], 4
      %s95 = int_to_ptr.vmem [resolvable:$true] %s94
      %100 = dma.hbm_to_vmem [thread:$0]  %s93, 1024, %s95, [#allocation12], 64, 64, 4
    $region33: #{tpu_custom_call.1} parent=1 // pred_fallthru
      _
    // Predicated region
    $region34: #{tpu_custom_call.1} parent=1 // pred_check
      _
    $region35: #{tpu_custom_call.1} parent=1 // pred_check_branch
      %102 = sbr.rel (0) target = $region37
    $region36: #{tpu_custom_call.1} parent=1 // pred_region
      _
    $region37: #{tpu_custom_call.1} parent=1 // pred_fallthru
      _
    // Predicated region
    $region38: #{tpu_custom_call.1} parent=1 // pred_check
      _
    $region39: #{tpu_custom_call.1} parent=1 // pred_check_branch
      %104 = sbr.rel (0) target = $region41
    $region40: #{tpu_custom_call.1} parent=1 // pred_region
      %106 = dma.done [#allocation3], 4096
    $region41: #{tpu_custom_call.1} parent=1 // pred_fallthru
      _
    // Predicated region
    $region42: #{tpu_custom_call.1} parent=1 // pred_check
      _
    $region43: #{tpu_custom_call.1} parent=1 // pred_check_branch
      %108 = sbr.rel (0) target = $region45
    $region44: #{tpu_custom_call.1} parent=1 // pred_region
      %110 = dma.done [#allocation6], 4096
    $region45: #{tpu_custom_call.1} parent=1 // pred_fallthru
      _
    // Predicated region
    $region46: #{tpu_custom_call.1} parent=1 // pred_check
      _
    $region47: #{tpu_custom_call.1} parent=1 // pred_check_branch
      %112 = sbr.rel (0) target = $region49
    $region48: #{tpu_custom_call.1} parent=1 // pred_region
      %114 = dma.done [#allocation6], 4096
    $region49: #{tpu_custom_call.1} parent=1 // pred_fallthru
      _
    // Predicated region
    $region50: #{tpu_custom_call.1} parent=1 // pred_check
      _
    $region51: #{tpu_custom_call.1} parent=1 // pred_check_branch
      %116 = sbr.rel (0) target = $region53
    $region52: #{tpu_custom_call.1} parent=1 // pred_region
      %118 = dma.done [#allocation9], 1024
    $region53: #{tpu_custom_call.1} parent=1 // pred_fallthru
      _
    // Predicated region
    $region54: #{tpu_custom_call.1} parent=1 // pred_check
      _
    $region55: #{tpu_custom_call.1} parent=1 // pred_check_branch
      %120 = sbr.rel (0) target = $region57
    $region56: #{tpu_custom_call.1} parent=1 // pred_region
      %122 = dma.done [#allocation9], 1024
    $region57: #{tpu_custom_call.1} parent=1 // pred_fallthru
      _
    // Predicated region
    $region58: #{tpu_custom_call.1} parent=1 // pred_check
      _
    $region59: #{tpu_custom_call.1} parent=1 // pred_check_branch
      %124 = sbr.rel (0) target = $region61
    $region60: #{tpu_custom_call.1} parent=1 // pred_region
      %126 = dma.done [#allocation12], 1024
    $region61: #{tpu_custom_call.1} parent=1 // pred_fallthru
      _
    %v127 = vld [vmem:[#allocation2] sm:$0xff]
    %v128 = vld [vmem:[#allocation2 + $0x8] sm:$0xff]
    %v129 = vld [vmem:[#allocation2 + $0x10] sm:$0xff]
    %v130 = vld [vmem:[#allocation2 + $0x18] sm:$0xff]
    %v131 = vld [vmem:[#allocation2 + $0x20] sm:$0xff]
    %v132 = vld [vmem:[#allocation2 + $0x28] sm:$0xff]
    %v133 = vld [vmem:[#allocation2 + $0x30] sm:$0xff]
    %v134 = vld [vmem:[#allocation2 + $0x38] sm:$0xff]
    %v135 = vld [vmem:[#allocation2 + $0x40] sm:$0xff]
    %v136 = vld [vmem:[#allocation2 + $0x48] sm:$0xff]
    %v137 = vld [vmem:[#allocation2 + $0x50] sm:$0xff]
    %v138 = vld [vmem:[#allocation2 + $0x58] sm:$0xff]
    %v139 = vld [vmem:[#allocation2 + $0x60] sm:$0xff]
    %v140 = vld [vmem:[#allocation2 + $0x68] sm:$0xff]
    %v141 = vld [vmem:[#allocation2 + $0x70] sm:$0xff]
    %v142 = vld [vmem:[#allocation2 + $0x78] sm:$0xff]
    %v143 = vld [vmem:[#allocation2 + $0x80] sm:$0xff]
    %v144 = vld [vmem:[#allocation2 + $0x88] sm:$0xff]
    %v145 = vld [vmem:[#allocation2 + $0x90] sm:$0xff]
    %v146 = vld [vmem:[#allocation2 + $0x98] sm:$0xff]
    %v147 = vld [vmem:[#allocation2 + $0xa0] sm:$0xff]
    %v148 = vld [vmem:[#allocation2 + $0xa8] sm:$0xff]
    %v149 = vld [vmem:[#allocation2 + $0xb0] sm:$0xff]
    %v150 = vld [vmem:[#allocation2 + $0xb8] sm:$0xff]
    %v151 = vld [vmem:[#allocation2 + $0xc0] sm:$0xff]
    %v152 = vld [vmem:[#allocation2 + $0xc8] sm:$0xff]
    %v153 = vld [vmem:[#allocation2 + $0xd0] sm:$0xff]
    %v154 = vld [vmem:[#allocation2 + $0xd8] sm:$0xff]
    %v155 = vld [vmem:[#allocation2 + $0xe0] sm:$0xff]
    %v156 = vld [vmem:[#allocation2 + $0xe8] sm:$0xff]
    %v157 = vld [vmem:[#allocation2 + $0xf0] sm:$0xff]
    %v158 = vld [vmem:[#allocation2 + $0xf8] sm:$0xff]
    %v159 = vpack.c.bf16 %v128, %v127
    %v160 = vpack.c.bf16 %v130, %v129
    %v161 = vpack.c.bf16 %v132, %v131
    %v162 = vpack.c.bf16 %v134, %v133
    %v163 = vpack.c.bf16 %v136, %v135
    %v164 = vpack.c.bf16 %v138, %v137
    %v165 = vpack.c.bf16 %v140, %v139
    %v166 = vpack.c.bf16 %v142, %v141
    %v167 = vpack.c.bf16 %v144, %v143
    %v168 = vpack.c.bf16 %v146, %v145
    %v169 = vpack.c.bf16 %v148, %v147
    %v170 = vpack.c.bf16 %v150, %v149
    %v171 = vpack.c.bf16 %v152, %v151
    %v172 = vpack.c.bf16 %v154, %v153
    %v173 = vpack.c.bf16 %v156, %v155
    %v174 = vpack.c.bf16 %v158, %v157
    %v175 = vld [vmem:[#allocation5] sm:$0xff]
    %v176 = vld [vmem:[#allocation5 + $0x8] sm:$0xff]
    %v177 = vld [vmem:[#allocation5 + $0x10] sm:$0xff]
    %v178 = vld [vmem:[#allocation5 + $0x18] sm:$0xff]
    %v179 = vld [vmem:[#allocation5 + $0x20] sm:$0xff]
    %v180 = vld [vmem:[#allocation5 + $0x28] sm:$0xff]
    %v181 = vld [vmem:[#allocation5 + $0x30] sm:$0xff]
    %v182 = vld [vmem:[#allocation5 + $0x38] sm:$0xff]
    %v183 = vld [vmem:[#allocation5 + $0x40] sm:$0xff]
    %v184 = vld [vmem:[#allocation5 + $0x48] sm:$0xff]
    %v185 = vld [vmem:[#allocation5 + $0x50] sm:$0xff]
    %v186 = vld [vmem:[#allocation5 + $0x58] sm:$0xff]
    %v187 = vld [vmem:[#allocation5 + $0x60] sm:$0xff]
    %v188 = vld [vmem:[#allocation5 + $0x68] sm:$0xff]
    %v189 = vld [vmem:[#allocation5 + $0x70] sm:$0xff]
    %v190 = vld [vmem:[#allocation5 + $0x78] sm:$0xff]
    %v191 = vld [vmem:[#allocation5 + $0x80] sm:$0xff]
    %v192 = vld [vmem:[#allocation5 + $0x88] sm:$0xff]
    %v193 = vld [vmem:[#allocation5 + $0x90] sm:$0xff]
    %v194 = vld [vmem:[#allocation5 + $0x98] sm:$0xff]
    %v195 = vld [vmem:[#allocation5 + $0xa0] sm:$0xff]
    %v196 = vld [vmem:[#allocation5 + $0xa8] sm:$0xff]
    %v197 = vld [vmem:[#allocation5 + $0xb0] sm:$0xff]
    %v198 = vld [vmem:[#allocation5 + $0xb8] sm:$0xff]
    %v199 = vld [vmem:[#allocation5 + $0xc0] sm:$0xff]
    %v200 = vld [vmem:[#allocation5 + $0xc8] sm:$0xff]
    %v201 = vld [vmem:[#allocation5 + $0xd0] sm:$0xff]
    %v202 = vld [vmem:[#allocation5 + $0xd8] sm:$0xff]
    %v203 = vld [vmem:[#allocation5 + $0xe0] sm:$0xff]
    %v204 = vld [vmem:[#allocation5 + $0xe8] sm:$0xff]
    %v205 = vld [vmem:[#allocation5 + $0xf0] sm:$0xff]
    %v206 = vld [vmem:[#allocation5 + $0xf8] sm:$0xff]
    %v207 = vpack.c.bf16 %v176, %v175
    %v208 = vpack.c.bf16 %v178, %v177
    %v209 = vpack.c.bf16 %v180, %v179
    %v210 = vpack.c.bf16 %v182, %v181
    %v211 = vpack.c.bf16 %v184, %v183
    %v212 = vpack.c.bf16 %v186, %v185
    %v213 = vpack.c.bf16 %v188, %v187
    %v214 = vpack.c.bf16 %v190, %v189
    %v215 = vpack.c.bf16 %v192, %v191
    %v216 = vpack.c.bf16 %v194, %v193
    %v217 = vpack.c.bf16 %v196, %v195
    %v218 = vpack.c.bf16 %v198, %v197
    %v219 = vpack.c.bf16 %v200, %v199
    %v220 = vpack.c.bf16 %v202, %v201
    %v221 = vpack.c.bf16 %v204, %v203
    %v222 = vpack.c.bf16 %v206, %v205
    %v223 = vld [vmem:[#allocation7] sm:$0xff]
    %v224 = vld [vmem:[#allocation7 + $0x8] sm:$0xff]
    %v225 = vld [vmem:[#allocation7 + $0x10] sm:$0xff]
    %v226 = vld [vmem:[#allocation7 + $0x18] sm:$0xff]
    %v227 = vld [vmem:[#allocation7 + $0x20] sm:$0xff]
    %v228 = vld [vmem:[#allocation7 + $0x28] sm:$0xff]
    %v229 = vld [vmem:[#allocation7 + $0x30] sm:$0xff]
    %v230 = vld [vmem:[#allocation7 + $0x38] sm:$0xff]
    %v231 = vld [vmem:[#allocation7 + $0x40] sm:$0xff]
    %v232 = vld [vmem:[#allocation7 + $0x48] sm:$0xff]
    %v233 = vld [vmem:[#allocation7 + $0x50] sm:$0xff]
    %v234 = vld [vmem:[#allocation7 + $0x58] sm:$0xff]
    %v235 = vld [vmem:[#allocation7 + $0x60] sm:$0xff]
    %v236 = vld [vmem:[#allocation7 + $0x68] sm:$0xff]
    %v237 = vld [vmem:[#allocation7 + $0x70] sm:$0xff]
    %v238 = vld [vmem:[#allocation7 + $0x78] sm:$0xff]
    %v239 = vld [vmem:[#allocation7 + $0x80] sm:$0xff]
    %v240 = vld [vmem:[#allocation7 + $0x88] sm:$0xff]
    %v241 = vld [vmem:[#allocation7 + $0x90] sm:$0xff]
    %v242 = vld [vmem:[#allocation7 + $0x98] sm:$0xff]
    %v243 = vld [vmem:[#allocation7 + $0xa0] sm:$0xff]
    %v244 = vld [vmem:[#allocation7 + $0xa8] sm:$0xff]
    %v245 = vld [vmem:[#allocation7 + $0xb0] sm:$0xff]
    %v246 = vld [vmem:[#allocation7 + $0xb8] sm:$0xff]
    %v247 = vld [vmem:[#allocation7 + $0xc0] sm:$0xff]
    %v248 = vld [vmem:[#allocation7 + $0xc8] sm:$0xff]
    %v249 = vld [vmem:[#allocation7 + $0xd0] sm:$0xff]
    %v250 = vld [vmem:[#allocation7 + $0xd8] sm:$0xff]
    %v251 = vld [vmem:[#allocation7 + $0xe0] sm:$0xff]
    %v252 = vld [vmem:[#allocation7 + $0xe8] sm:$0xff]
    %v253 = vld [vmem:[#allocation7 + $0xf0] sm:$0xff]
    %v254 = vld [vmem:[#allocation7 + $0xf8] sm:$0xff]
    %v255 = vpack.c.bf16 %v224, %v223
    %v256 = vpack.c.bf16 %v226, %v225
    %v257 = vpack.c.bf16 %v228, %v227
    %v258 = vpack.c.bf16 %v230, %v229
    %v259 = vpack.c.bf16 %v232, %v231
    %v260 = vpack.c.bf16 %v234, %v233
    %v261 = vpack.c.bf16 %v236, %v235
    %v262 = vpack.c.bf16 %v238, %v237
    %v263 = vpack.c.bf16 %v240, %v239
    %v264 = vpack.c.bf16 %v242, %v241
    %v265 = vpack.c.bf16 %v244, %v243
    %v266 = vpack.c.bf16 %v246, %v245
    %v267 = vpack.c.bf16 %v248, %v247
    %v268 = vpack.c.bf16 %v250, %v249
    %v269 = vpack.c.bf16 %v252, %v251
    %v270 = vpack.c.bf16 %v254, %v253
    %v271 = vld [vmem:[#allocation8] sm:$0xf]
    %v272 = vld [vmem:[#allocation8 + $0x4] sm:$0xf]
    %v273 = vld [vmem:[#allocation8 + $0x8] sm:$0xf]
    %v274 = vld [vmem:[#allocation8 + $0xc] sm:$0xf]
    %v275 = vld [vmem:[#allocation8 + $0x10] sm:$0xf]
    %v276 = vld [vmem:[#allocation8 + $0x14] sm:$0xf]
    %v277 = vld [vmem:[#allocation8 + $0x18] sm:$0xf]
    %v278 = vld [vmem:[#allocation8 + $0x1c] sm:$0xf]
    %v279 = vld [vmem:[#allocation8 + $0x20] sm:$0xf]
    %v280 = vld [vmem:[#allocation8 + $0x24] sm:$0xf]
    %v281 = vld [vmem:[#allocation8 + $0x28] sm:$0xf]
    %v282 = vld [vmem:[#allocation8 + $0x2c] sm:$0xf]
    %v283 = vld [vmem:[#allocation8 + $0x30] sm:$0xf]
    %v284 = vld [vmem:[#allocation8 + $0x34] sm:$0xf]
    %v285 = vld [vmem:[#allocation8 + $0x38] sm:$0xf]
    %v286 = vld [vmem:[#allocation8 + $0x3c] sm:$0xf]
    %v287 = vld [vmem:[%s4] sm:$0x1]
    %v289 = vperm.slane %v287, 0
    %v307 = vunpack.c.l.b16 %v271
    %v308 = vunpack.c.l.b16 %v272
    %v309 = vunpack.c.l.b16 %v273
    %v310 = vunpack.c.l.b16 %v274
    %v311 = vunpack.c.l.b16 %v275
    %v312 = vunpack.c.l.b16 %v276
    %v313 = vunpack.c.l.b16 %v277
    %v314 = vunpack.c.l.b16 %v278
    %v315 = vunpack.c.l.b16 %v279
    %v316 = vunpack.c.l.b16 %v280
    %v317 = vunpack.c.l.b16 %v281
    %v318 = vunpack.c.l.b16 %v282
    %v319 = vunpack.c.l.b16 %v283
    %v320 = vunpack.c.l.b16 %v284
    %v321 = vunpack.c.l.b16 %v285
    %v322 = vunpack.c.l.b16 %v286
    %v323 = vpack.c.b16 %v308, %v307
    %v324 = vpack.c.b16 %v310, %v309
    %v325 = vpack.c.b16 %v312, %v311
    %v326 = vpack.c.b16 %v314, %v313
    %v327 = vpack.c.b16 %v316, %v315
    %v328 = vpack.c.b16 %v318, %v317
    %v329 = vpack.c.b16 %v320, %v319
    %v330 = vpack.c.b16 %v322, %v321
    %339 = vmatpush.bf16.msra.mxu0 %v330
    %340 = vmatpush.bf16.msra.mxu0 %v329
    %341 = vmatpush.bf16.msra.mxu0 %v328
    %342 = vmatpush.bf16.msra.mxu0 %v327
    %343 = vmatpush.bf16.msra.mxu0 %v326
    %344 = vmatpush.bf16.msra.mxu0 %v325
    %345 = vmatpush.bf16.msra.mxu0 %v324
    %346 = vmatpush.bf16.msra.mxu0 %v323
    %347 = vmatmul.bf16.gmra.mxu0 %v159
    %v348 = vpop.f32.mrf.mxu0
    %v349 = vadd.f32 %v289, %v348
    %v350 = vpop.f32.mrf.mxu0
    %v351 = vadd.f32 %v289, %v350
    %352 = vmatmul.bf16.gmra.mxu0 %v160
    %v353 = vpop.f32.mrf.mxu0
    %v354 = vadd.f32 %v289, %v353
    %v355 = vpop.f32.mrf.mxu0
    %v356 = vadd.f32 %v289, %v355
    %357 = vmatmul.bf16.gmra.mxu0 %v161
    %v358 = vpop.f32.mrf.mxu0
    %v359 = vadd.f32 %v289, %v358
    %v360 = vpop.f32.mrf.mxu0
    %v361 = vadd.f32 %v289, %v360
    %362 = vmatmul.bf16.gmra.mxu0 %v162
    %v363 = vpop.f32.mrf.mxu0
    %v364 = vadd.f32 %v289, %v363
    %v365 = vpop.f32.mrf.mxu0
    %v366 = vadd.f32 %v289, %v365
    %367 = vmatmul.bf16.gmra.mxu0 %v163
    %v368 = vpop.f32.mrf.mxu0
    %v369 = vadd.f32 %v289, %v368
    %v370 = vpop.f32.mrf.mxu0
    %v371 = vadd.f32 %v289, %v370
    %372 = vmatmul.bf16.gmra.mxu0 %v164
    %v373 = vpop.f32.mrf.mxu0
    %v374 = vadd.f32 %v289, %v373
    %v375 = vpop.f32.mrf.mxu0
    %v376 = vadd.f32 %v289, %v375
    %377 = vmatmul.bf16.gmra.mxu0 %v165
    %v378 = vpop.f32.mrf.mxu0
    %v379 = vadd.f32 %v289, %v378
    %v380 = vpop.f32.mrf.mxu0
    %v381 = vadd.f32 %v289, %v380
    %382 = vmatmul.bf16.gmra.mxu0 %v166
    %v383 = vpop.f32.mrf.mxu0
    %v384 = vadd.f32 %v289, %v383
    %v385 = vpop.f32.mrf.mxu0
    %v386 = vadd.f32 %v289, %v385
    %387 = vmatmul.bf16.gmra.mxu0 %v167
    %v388 = vpop.f32.mrf.mxu0
    %v389 = vadd.f32 %v289, %v388
    %v390 = vpop.f32.mrf.mxu0
    %v391 = vadd.f32 %v289, %v390
    %392 = vmatmul.bf16.gmra.mxu0 %v168
    %v393 = vpop.f32.mrf.mxu0
    %v394 = vadd.f32 %v289, %v393
    %v395 = vpop.f32.mrf.mxu0
    %v396 = vadd.f32 %v289, %v395
    %397 = vmatmul.bf16.gmra.mxu0 %v169
    %v398 = vpop.f32.mrf.mxu0
    %v399 = vadd.f32 %v289, %v398
    %v400 = vpop.f32.mrf.mxu0
    %v401 = vadd.f32 %v289, %v400
    %402 = vmatmul.bf16.gmra.mxu0 %v170
    %v403 = vpop.f32.mrf.mxu0
    %v404 = vadd.f32 %v289, %v403
    %v405 = vpop.f32.mrf.mxu0
    %v406 = vadd.f32 %v289, %v405
    %407 = vmatmul.bf16.gmra.mxu0 %v171
    %v408 = vpop.f32.mrf.mxu0
    %v409 = vadd.f32 %v289, %v408
    %v410 = vpop.f32.mrf.mxu0
    %v411 = vadd.f32 %v289, %v410
    %412 = vmatmul.bf16.gmra.mxu0 %v172
    %v413 = vpop.f32.mrf.mxu0
    %v414 = vadd.f32 %v289, %v413
    %v415 = vpop.f32.mrf.mxu0
    %v416 = vadd.f32 %v289, %v415
    %417 = vmatmul.bf16.gmra.mxu0 %v173
    %v418 = vpop.f32.mrf.mxu0
    %v419 = vadd.f32 %v289, %v418
    %v420 = vpop.f32.mrf.mxu0
    %v421 = vadd.f32 %v289, %v420
    %422 = vmatmul.bf16.gmra.mxu0 %v174
    %v423 = vpop.f32.mrf.mxu0
    %v424 = vadd.f32 %v289, %v423
    %v425 = vpop.f32.mrf.mxu0
    %v426 = vadd.f32 %v289, %v425
    %427 = vdwg.mxu0
    %v428 = vld [vmem:[#allocation10] sm:$0xf]
    %v429 = vld [vmem:[#allocation10 + $0x4] sm:$0xf]
    %v430 = vld [vmem:[#allocation10 + $0x8] sm:$0xf]
    %v431 = vld [vmem:[#allocation10 + $0xc] sm:$0xf]
    %v432 = vld [vmem:[#allocation10 + $0x10] sm:$0xf]
    %v433 = vld [vmem:[#allocation10 + $0x14] sm:$0xf]
    %v434 = vld [vmem:[#allocation10 + $0x18] sm:$0xf]
    %v435 = vld [vmem:[#allocation10 + $0x1c] sm:$0xf]
    %v436 = vld [vmem:[#allocation10 + $0x20] sm:$0xf]
    %v437 = vld [vmem:[#allocation10 + $0x24] sm:$0xf]
    %v438 = vld [vmem:[#allocation10 + $0x28] sm:$0xf]
    %v439 = vld [vmem:[#allocation10 + $0x2c] sm:$0xf]
    %v440 = vld [vmem:[#allocation10 + $0x30] sm:$0xf]
    %v441 = vld [vmem:[#allocation10 + $0x34] sm:$0xf]
    %v442 = vld [vmem:[#allocation10 + $0x38] sm:$0xf]
    %v443 = vld [vmem:[#allocation10 + $0x3c] sm:$0xf]
    %v444 = vld [vmem:[%s6] sm:$0x1]
    %v446 = vperm.slane %v444, 0
    %v464 = vunpack.c.l.b16 %v428
    %v465 = vunpack.c.l.b16 %v429
    %v466 = vunpack.c.l.b16 %v430
    %v467 = vunpack.c.l.b16 %v431
    %v468 = vunpack.c.l.b16 %v432
    %v469 = vunpack.c.l.b16 %v433
    %v470 = vunpack.c.l.b16 %v434
    %v471 = vunpack.c.l.b16 %v435
    %v472 = vunpack.c.l.b16 %v436
    %v473 = vunpack.c.l.b16 %v437
    %v474 = vunpack.c.l.b16 %v438
    %v475 = vunpack.c.l.b16 %v439
    %v476 = vunpack.c.l.b16 %v440
    %v477 = vunpack.c.l.b16 %v441
    %v478 = vunpack.c.l.b16 %v442
    %v479 = vunpack.c.l.b16 %v443
    %v480 = vpack.c.b16 %v465, %v464
    %v481 = vpack.c.b16 %v467, %v466
    %v482 = vpack.c.b16 %v469, %v468
    %v483 = vpack.c.b16 %v471, %v470
    %v484 = vpack.c.b16 %v473, %v472
    %v485 = vpack.c.b16 %v475, %v474
    %v486 = vpack.c.b16 %v477, %v476
    %v487 = vpack.c.b16 %v479, %v478
    %496 = vmatpush.bf16.msra.mxu0 %v487
    %497 = vmatpush.bf16.msra.mxu0 %v486
    %498 = vmatpush.bf16.msra.mxu0 %v485
    %499 = vmatpush.bf16.msra.mxu0 %v484
    %500 = vmatpush.bf16.msra.mxu0 %v483
    %501 = vmatpush.bf16.msra.mxu0 %v482
    %502 = vmatpush.bf16.msra.mxu0 %v481
    %503 = vmatpush.bf16.msra.mxu0 %v480
    %504 = vmatmul.bf16.gmra.mxu0 %v207
    %v505 = vpop.f32.mrf.mxu0
    %v506 = vadd.f32 %v446, %v505
    %v507 = vpop.f32.mrf.mxu0
    %v508 = vadd.f32 %v446, %v507
    %509 = vmatmul.bf16.gmra.mxu0 %v208
    %v510 = vpop.f32.mrf.mxu0
    %v511 = vadd.f32 %v446, %v510
    %v512 = vpop.f32.mrf.mxu0
    %v513 = vadd.f32 %v446, %v512
    %514 = vmatmul.bf16.gmra.mxu0 %v209
    %v515 = vpop.f32.mrf.mxu0
    %v516 = vadd.f32 %v446, %v515
    %v517 = vpop.f32.mrf.mxu0
    %v518 = vadd.f32 %v446, %v517
    %519 = vmatmul.bf16.gmra.mxu0 %v210
    %v520 = vpop.f32.mrf.mxu0
    %v521 = vadd.f32 %v446, %v520
    %v522 = vpop.f32.mrf.mxu0
    %v523 = vadd.f32 %v446, %v522
    %524 = vmatmul.bf16.gmra.mxu0 %v211
    %v525 = vpop.f32.mrf.mxu0
    %v526 = vadd.f32 %v446, %v525
    %v527 = vpop.f32.mrf.mxu0
    %v528 = vadd.f32 %v446, %v527
    %529 = vmatmul.bf16.gmra.mxu0 %v212
    %v530 = vpop.f32.mrf.mxu0
    %v531 = vadd.f32 %v446, %v530
    %v532 = vpop.f32.mrf.mxu0
    %v533 = vadd.f32 %v446, %v532
    %534 = vmatmul.bf16.gmra.mxu0 %v213
    %v535 = vpop.f32.mrf.mxu0
    %v536 = vadd.f32 %v446, %v535
    %v537 = vpop.f32.mrf.mxu0
    %v538 = vadd.f32 %v446, %v537
    %539 = vmatmul.bf16.gmra.mxu0 %v214
    %v540 = vpop.f32.mrf.mxu0
    %v541 = vadd.f32 %v446, %v540
    %v542 = vpop.f32.mrf.mxu0
    %v543 = vadd.f32 %v446, %v542
    %544 = vmatmul.bf16.gmra.mxu0 %v215
    %v545 = vpop.f32.mrf.mxu0
    %v546 = vadd.f32 %v446, %v545
    %v547 = vpop.f32.mrf.mxu0
    %v548 = vadd.f32 %v446, %v547
    %549 = vmatmul.bf16.gmra.mxu0 %v216
    %v550 = vpop.f32.mrf.mxu0
    %v551 = vadd.f32 %v446, %v550
    %v552 = vpop.f32.mrf.mxu0
    %v553 = vadd.f32 %v446, %v552
    %554 = vmatmul.bf16.gmra.mxu0 %v217
    %v555 = vpop.f32.mrf.mxu0
    %v556 = vadd.f32 %v446, %v555
    %v557 = vpop.f32.mrf.mxu0
    %v558 = vadd.f32 %v446, %v557
    %559 = vmatmul.bf16.gmra.mxu0 %v218
    %v560 = vpop.f32.mrf.mxu0
    %v561 = vadd.f32 %v446, %v560
    %v562 = vpop.f32.mrf.mxu0
    %v563 = vadd.f32 %v446, %v562
    %564 = vmatmul.bf16.gmra.mxu0 %v219
    %v565 = vpop.f32.mrf.mxu0
    %v566 = vadd.f32 %v446, %v565
    %v567 = vpop.f32.mrf.mxu0
    %v568 = vadd.f32 %v446, %v567
    %569 = vmatmul.bf16.gmra.mxu0 %v220
    %v570 = vpop.f32.mrf.mxu0
    %v571 = vadd.f32 %v446, %v570
    %v572 = vpop.f32.mrf.mxu0
    %v573 = vadd.f32 %v446, %v572
    %574 = vmatmul.bf16.gmra.mxu0 %v221
    %v575 = vpop.f32.mrf.mxu0
    %v576 = vadd.f32 %v446, %v575
    %v577 = vpop.f32.mrf.mxu0
    %v578 = vadd.f32 %v446, %v577
    %579 = vmatmul.bf16.gmra.mxu0 %v222
    %v580 = vpop.f32.mrf.mxu0
    %v581 = vadd.f32 %v446, %v580
    %v582 = vpop.f32.mrf.mxu0
    %v583 = vadd.f32 %v446, %v582
    %584 = vdwg.mxu0
    %v585 = vld [vmem:[#allocation11] sm:$0xf]
    %v586 = vld [vmem:[#allocation11 + $0x4] sm:$0xf]
    %v587 = vld [vmem:[#allocation11 + $0x8] sm:$0xf]
    %v588 = vld [vmem:[#allocation11 + $0xc] sm:$0xf]
    %v589 = vld [vmem:[#allocation11 + $0x10] sm:$0xf]
    %v590 = vld [vmem:[#allocation11 + $0x14] sm:$0xf]
    %v591 = vld [vmem:[#allocation11 + $0x18] sm:$0xf]
    %v592 = vld [vmem:[#allocation11 + $0x1c] sm:$0xf]
    %v593 = vld [vmem:[#allocation11 + $0x20] sm:$0xf]
    %v594 = vld [vmem:[#allocation11 + $0x24] sm:$0xf]
    %v595 = vld [vmem:[#allocation11 + $0x28] sm:$0xf]
    %v596 = vld [vmem:[#allocation11 + $0x2c] sm:$0xf]
    %v597 = vld [vmem:[#allocation11 + $0x30] sm:$0xf]
    %v598 = vld [vmem:[#allocation11 + $0x34] sm:$0xf]
    %v599 = vld [vmem:[#allocation11 + $0x38] sm:$0xf]
    %v600 = vld [vmem:[#allocation11 + $0x3c] sm:$0xf]
    %v601 = vld [vmem:[%s8] sm:$0x1]
    %v603 = vperm.slane %v601, 0
    %v621 = vunpack.c.l.b16 %v585
    %v622 = vunpack.c.l.b16 %v586
    %v623 = vunpack.c.l.b16 %v587
    %v624 = vunpack.c.l.b16 %v588
    %v625 = vunpack.c.l.b16 %v589
    %v626 = vunpack.c.l.b16 %v590
    %v627 = vunpack.c.l.b16 %v591
    %v628 = vunpack.c.l.b16 %v592
    %v629 = vunpack.c.l.b16 %v593
    %v630 = vunpack.c.l.b16 %v594
    %v631 = vunpack.c.l.b16 %v595
    %v632 = vunpack.c.l.b16 %v596
    %v633 = vunpack.c.l.b16 %v597
    %v634 = vunpack.c.l.b16 %v598
    %v635 = vunpack.c.l.b16 %v599
    %v636 = vunpack.c.l.b16 %v600
    %v637 = vpack.c.b16 %v622, %v621
    %v638 = vpack.c.b16 %v624, %v623
    %v639 = vpack.c.b16 %v626, %v625
    %v640 = vpack.c.b16 %v628, %v627
    %v641 = vpack.c.b16 %v630, %v629
    %v642 = vpack.c.b16 %v632, %v631
    %v643 = vpack.c.b16 %v634, %v633
    %v644 = vpack.c.b16 %v636, %v635
    %653 = vmatpush.bf16.msra.mxu0 %v644
    %654 = vmatpush.bf16.msra.mxu0 %v643
    %655 = vmatpush.bf16.msra.mxu0 %v642
    %656 = vmatpush.bf16.msra.mxu0 %v641
    %657 = vmatpush.bf16.msra.mxu0 %v640
    %658 = vmatpush.bf16.msra.mxu0 %v639
    %659 = vmatpush.bf16.msra.mxu0 %v638
    %660 = vmatpush.bf16.msra.mxu0 %v637
    %661 = vmatmul.bf16.gmra.mxu0 %v255
    %v662 = vpop.f32.mrf.mxu0
    %v663 = vadd.f32 %v603, %v662
    %v664 = vpop.f32.mrf.mxu0
    %v665 = vadd.f32 %v603, %v664
    %666 = vmatmul.bf16.gmra.mxu0 %v256
    %v667 = vpop.f32.mrf.mxu0
    %v668 = vadd.f32 %v603, %v667
    %v669 = vpop.f32.mrf.mxu0
    %v670 = vadd.f32 %v603, %v669
    %671 = vmatmul.bf16.gmra.mxu0 %v257
    %v672 = vpop.f32.mrf.mxu0
    %v673 = vadd.f32 %v603, %v672
    %v674 = vpop.f32.mrf.mxu0
    %v675 = vadd.f32 %v603, %v674
    %676 = vmatmul.bf16.gmra.mxu0 %v258
    %v677 = vpop.f32.mrf.mxu0
    %v678 = vadd.f32 %v603, %v677
    %v679 = vpop.f32.mrf.mxu0
    %v680 = vadd.f32 %v603, %v679
    %681 = vmatmul.bf16.gmra.mxu0 %v259
    %v682 = vpop.f32.mrf.mxu0
    %v683 = vadd.f32 %v603, %v682
    %v684 = vpop.f32.mrf.mxu0
    %v685 = vadd.f32 %v603, %v684
    %686 = vmatmul.bf16.gmra.mxu0 %v260
    %v687 = vpop.f32.mrf.mxu0
    %v688 = vadd.f32 %v603, %v687
    %v689 = vpop.f32.mrf.mxu0
    %v690 = vadd.f32 %v603, %v689
    %691 = vmatmul.bf16.gmra.mxu0 %v261
    %v692 = vpop.f32.mrf.mxu0
    %v693 = vadd.f32 %v603, %v692
    %v694 = vpop.f32.mrf.mxu0
    %v695 = vadd.f32 %v603, %v694
    %696 = vmatmul.bf16.gmra.mxu0 %v262
    %v697 = vpop.f32.mrf.mxu0
    %v698 = vadd.f32 %v603, %v697
    %v699 = vpop.f32.mrf.mxu0
    %v700 = vadd.f32 %v603, %v699
    %701 = vmatmul.bf16.gmra.mxu0 %v263
    %v702 = vpop.f32.mrf.mxu0
    %v703 = vadd.f32 %v603, %v702
    %v704 = vpop.f32.mrf.mxu0
    %v705 = vadd.f32 %v603, %v704
    %706 = vmatmul.bf16.gmra.mxu0 %v264
    %v707 = vpop.f32.mrf.mxu0
    %v708 = vadd.f32 %v603, %v707
    %v709 = vpop.f32.mrf.mxu0
    %v710 = vadd.f32 %v603, %v709
    %711 = vmatmul.bf16.gmra.mxu0 %v265
    %v712 = vpop.f32.mrf.mxu0
    %v713 = vadd.f32 %v603, %v712
    %v714 = vpop.f32.mrf.mxu0
    %v715 = vadd.f32 %v603, %v714
    %716 = vmatmul.bf16.gmra.mxu0 %v266
    %v717 = vpop.f32.mrf.mxu0
    %v718 = vadd.f32 %v603, %v717
    %v719 = vpop.f32.mrf.mxu0
    %v720 = vadd.f32 %v603, %v719
    %721 = vmatmul.bf16.gmra.mxu0 %v267
    %v722 = vpop.f32.mrf.mxu0
    %v723 = vadd.f32 %v603, %v722
    %v724 = vpop.f32.mrf.mxu0
    %v725 = vadd.f32 %v603, %v724
    %726 = vmatmul.bf16.gmra.mxu0 %v268
    %v727 = vpop.f32.mrf.mxu0
    %v728 = vadd.f32 %v603, %v727
    %v729 = vpop.f32.mrf.mxu0
    %v730 = vadd.f32 %v603, %v729
    %731 = vmatmul.bf16.gmra.mxu0 %v269
    %v732 = vpop.f32.mrf.mxu0
    %v733 = vadd.f32 %v603, %v732
    %v734 = vpop.f32.mrf.mxu0
    %v735 = vadd.f32 %v603, %v734
    %736 = vmatmul.bf16.gmra.mxu0 %v270
    %v737 = vpop.f32.mrf.mxu0
    %v738 = vadd.f32 %v603, %v737
    %v739 = vpop.f32.mrf.mxu0
    %v740 = vadd.f32 %v603, %v739
    %741 = vdwg.mxu0
    %v742 = vpack.c.bf16 %v349, %v349
    %v743 = vpack.c.bf16 %v351, %v351
    %v744 = vpack.c.bf16 %v354, %v354
    %v745 = vpack.c.bf16 %v356, %v356
    %v746 = vpack.c.bf16 %v359, %v359
    %v747 = vpack.c.bf16 %v361, %v361
    %v748 = vpack.c.bf16 %v364, %v364
    %v749 = vpack.c.bf16 %v366, %v366
    %v750 = vpack.c.bf16 %v369, %v369
    %v751 = vpack.c.bf16 %v371, %v371
    %v752 = vpack.c.bf16 %v374, %v374
    %v753 = vpack.c.bf16 %v376, %v376
    %v754 = vpack.c.bf16 %v379, %v379
    %v755 = vpack.c.bf16 %v381, %v381
    %v756 = vpack.c.bf16 %v384, %v384
    %v757 = vpack.c.bf16 %v386, %v386
    %v758 = vpack.c.bf16 %v389, %v389
    %v759 = vpack.c.bf16 %v391, %v391
    %v760 = vpack.c.bf16 %v394, %v394
    %v761 = vpack.c.bf16 %v396, %v396
    %v762 = vpack.c.bf16 %v399, %v399
    %v763 = vpack.c.bf16 %v401, %v401
    %v764 = vpack.c.bf16 %v404, %v404
    %v765 = vpack.c.bf16 %v406, %v406
    %v766 = vpack.c.bf16 %v409, %v409
    %v767 = vpack.c.bf16 %v411, %v411
    %v768 = vpack.c.bf16 %v414, %v414
    %v769 = vpack.c.bf16 %v416, %v416
    %v770 = vpack.c.bf16 %v419, %v419
    %v771 = vpack.c.bf16 %v421, %v421
    %v772 = vpack.c.bf16 %v424, %v424
    %v773 = vpack.c.bf16 %v426, %v426
    %v774 = vpack.c.bf16 %v506, %v506
    %v775 = vpack.c.bf16 %v508, %v508
    %v776 = vpack.c.bf16 %v511, %v511
    %v777 = vpack.c.bf16 %v513, %v513
    %v778 = vpack.c.bf16 %v516, %v516
    %v779 = vpack.c.bf16 %v518, %v518
    %v780 = vpack.c.bf16 %v521, %v521
    %v781 = vpack.c.bf16 %v523, %v523
    %v782 = vpack.c.bf16 %v526, %v526
    %v783 = vpack.c.bf16 %v528, %v528
    %v784 = vpack.c.bf16 %v531, %v531
    %v785 = vpack.c.bf16 %v533, %v533
    %v786 = vpack.c.bf16 %v536, %v536
    %v787 = vpack.c.bf16 %v538, %v538
    %v788 = vpack.c.bf16 %v541, %v541
    %v789 = vpack.c.bf16 %v543, %v543
    %v790 = vpack.c.bf16 %v546, %v546
    %v791 = vpack.c.bf16 %v548, %v548
    %v792 = vpack.c.bf16 %v551, %v551
    %v793 = vpack.c.bf16 %v553, %v553
    %v794 = vpack.c.bf16 %v556, %v556
    %v795 = vpack.c.bf16 %v558, %v558
    %v796 = vpack.c.bf16 %v561, %v561
    %v797 = vpack.c.bf16 %v563, %v563
    %v798 = vpack.c.bf16 %v566, %v566
    %v799 = vpack.c.bf16 %v568, %v568
    %v800 = vpack.c.bf16 %v571, %v571
    %v801 = vpack.c.bf16 %v573, %v573
    %v802 = vpack.c.bf16 %v576, %v576
    %v803 = vpack.c.bf16 %v578, %v578
    %v804 = vpack.c.bf16 %v581, %v581
    %v805 = vpack.c.bf16 %v583, %v583
    %v806 = vpack.c.bf16 %v663, %v663
    %v807 = vpack.c.bf16 %v665, %v665
    %v808 = vpack.c.bf16 %v668, %v668
    %v809 = vpack.c.bf16 %v670, %v670
    %v810 = vpack.c.bf16 %v673, %v673
    %v811 = vpack.c.bf16 %v675, %v675
    %v812 = vpack.c.bf16 %v678, %v678
    %v813 = vpack.c.bf16 %v680, %v680
    %v814 = vpack.c.bf16 %v683, %v683
    %v815 = vpack.c.bf16 %v685, %v685
    %v816 = vpack.c.bf16 %v688, %v688
    %v817 = vpack.c.bf16 %v690, %v690
    %v818 = vpack.c.bf16 %v693, %v693
    %v819 = vpack.c.bf16 %v695, %v695
    %v820 = vpack.c.bf16 %v698, %v698
    %v821 = vpack.c.bf16 %v700, %v700
    %v822 = vpack.c.bf16 %v703, %v703
    %v823 = vpack.c.bf16 %v705, %v705
    %v824 = vpack.c.bf16 %v708, %v708
    %v825 = vpack.c.bf16 %v710, %v710
    %v826 = vpack.c.bf16 %v713, %v713
    %v827 = vpack.c.bf16 %v715, %v715
    %v828 = vpack.c.bf16 %v718, %v718
    %v829 = vpack.c.bf16 %v720, %v720
    %v830 = vpack.c.bf16 %v723, %v723
    %v831 = vpack.c.bf16 %v725, %v725
    %v832 = vpack.c.bf16 %v728, %v728
    %v833 = vpack.c.bf16 %v730, %v730
    %v834 = vpack.c.bf16 %v733, %v733
    %v835 = vpack.c.bf16 %v735, %v735
    %v836 = vpack.c.bf16 %v738, %v738
    %v837 = vpack.c.bf16 %v740, %v740
    %v854 = vunpack.c.l.b16 %v742
    %v855 = vunpack.c.l.b16 %v743
    %v856 = vunpack.c.l.b16 %v744
    %v857 = vunpack.c.l.b16 %v745
    %v858 = vunpack.c.l.b16 %v746
    %v859 = vunpack.c.l.b16 %v747
    %v860 = vunpack.c.l.b16 %v748
    %v861 = vunpack.c.l.b16 %v749
    %v862 = vunpack.c.l.b16 %v750
    %v863 = vunpack.c.l.b16 %v751
    %v864 = vunpack.c.l.b16 %v752
    %v865 = vunpack.c.l.b16 %v753
    %v866 = vunpack.c.l.b16 %v754
    %v867 = vunpack.c.l.b16 %v755
    %v868 = vunpack.c.l.b16 %v756
    %v869 = vunpack.c.l.b16 %v757
    %v870 = vpack.c.b16 %v855, %v854
    %v871 = vpack.c.b16 %v857, %v856
    %v872 = vpack.c.b16 %v859, %v858
    %v873 = vpack.c.b16 %v861, %v860
    %v874 = vpack.c.b16 %v863, %v862
    %v875 = vpack.c.b16 %v865, %v864
    %v876 = vpack.c.b16 %v867, %v866
    %v877 = vpack.c.b16 %v869, %v868
    %v902 = vunpack.c.l.b16 %v774
    %v903 = vunpack.c.l.b16 %v775
    %v904 = vunpack.c.l.b16 %v776
    %v905 = vunpack.c.l.b16 %v777
    %v906 = vunpack.c.l.b16 %v778
    %v907 = vunpack.c.l.b16 %v779
    %v908 = vunpack.c.l.b16 %v780
    %v909 = vunpack.c.l.b16 %v781
    %v910 = vunpack.c.l.b16 %v782
    %v911 = vunpack.c.l.b16 %v783
    %v912 = vunpack.c.l.b16 %v784
    %v913 = vunpack.c.l.b16 %v785
    %v914 = vunpack.c.l.b16 %v786
    %v915 = vunpack.c.l.b16 %v787
    %v916 = vunpack.c.l.b16 %v788
    %v917 = vunpack.c.l.b16 %v789
    %v918 = vpack.c.b16 %v903, %v902
    %v919 = vpack.c.b16 %v905, %v904
    %v920 = vpack.c.b16 %v907, %v906
    %v921 = vpack.c.b16 %v909, %v908
    %v922 = vpack.c.b16 %v911, %v910
    %v923 = vpack.c.b16 %v913, %v912
    %v924 = vpack.c.b16 %v915, %v914
    %v925 = vpack.c.b16 %v917, %v916
    %934 = vmatpush.bf16.xpose.msra.mxu0 %v925
    %935 = vmatpush.bf16.xpose.msra.mxu0 %v924
    %936 = vmatpush.bf16.xpose.msra.mxu0 %v923
    %937 = vmatpush.bf16.xpose.msra.mxu0 %v922
    %938 = vmatpush.bf16.xpose.msra.mxu0 %v921
    %939 = vmatpush.bf16.xpose.msra.mxu0 %v920
    %940 = vmatpush.bf16.xpose.msra.mxu0 %v919
    %941 = vmatpush.bf16.xpose.msra.mxu0 %v918
    %942 = vmatmul.bf16.gmra.mxu0 %v870
    %v943 = vpop.f32.mrf.mxu0
    %v944 = vadd.f32 0.0, %v943
    %v945 = vpop.f32.mrf.mxu0
    %v946 = vadd.f32 0.0, %v945
    %947 = vmatmul.bf16.gmra.mxu0 %v871
    %v948 = vpop.f32.mrf.mxu0
    %v949 = vadd.f32 0.0, %v948
    %v950 = vpop.f32.mrf.mxu0
    %v951 = vadd.f32 0.0, %v950
    %952 = vmatmul.bf16.gmra.mxu0 %v872
    %v953 = vpop.f32.mrf.mxu0
    %v954 = vadd.f32 0.0, %v953
    %v955 = vpop.f32.mrf.mxu0
    %v956 = vadd.f32 0.0, %v955
    %957 = vmatmul.bf16.gmra.mxu0 %v873
    %v958 = vpop.f32.mrf.mxu0
    %v959 = vadd.f32 0.0, %v958
    %v960 = vpop.f32.mrf.mxu0
    %v961 = vadd.f32 0.0, %v960
    %962 = vmatmul.bf16.gmra.mxu0 %v874
    %v963 = vpop.f32.mrf.mxu0
    %v964 = vadd.f32 0.0, %v963
    %v965 = vpop.f32.mrf.mxu0
    %v966 = vadd.f32 0.0, %v965
    %967 = vmatmul.bf16.gmra.mxu0 %v875
    %v968 = vpop.f32.mrf.mxu0
    %v969 = vadd.f32 0.0, %v968
    %v970 = vpop.f32.mrf.mxu0
    %v971 = vadd.f32 0.0, %v970
    %972 = vmatmul.bf16.gmra.mxu0 %v876
    %v973 = vpop.f32.mrf.mxu0
    %v974 = vadd.f32 0.0, %v973
    %v975 = vpop.f32.mrf.mxu0
    %v976 = vadd.f32 0.0, %v975
    %977 = vmatmul.bf16.gmra.mxu0 %v877
    %v978 = vpop.f32.mrf.mxu0
    %v979 = vadd.f32 0.0, %v978
    %v980 = vpop.f32.mrf.mxu0
    %v981 = vadd.f32 0.0, %v980
    %982 = vdwg.mxu0
    %v999 = vunpack.c.l.b16 %v758
    %v1000 = vunpack.c.l.b16 %v759
    %v1001 = vunpack.c.l.b16 %v760
    %v1002 = vunpack.c.l.b16 %v761
    %v1003 = vunpack.c.l.b16 %v762
    %v1004 = vunpack.c.l.b16 %v763
    %v1005 = vunpack.c.l.b16 %v764
    %v1006 = vunpack.c.l.b16 %v765
    %v1007 = vunpack.c.l.b16 %v766
    %v1008 = vunpack.c.l.b16 %v767
    %v1009 = vunpack.c.l.b16 %v768
    %v1010 = vunpack.c.l.b16 %v769
    %v1011 = vunpack.c.l.b16 %v770
    %v1012 = vunpack.c.l.b16 %v771
    %v1013 = vunpack.c.l.b16 %v772
    %v1014 = vunpack.c.l.b16 %v773
    %v1015 = vpack.c.b16 %v1000, %v999
    %v1016 = vpack.c.b16 %v1002, %v1001
    %v1017 = vpack.c.b16 %v1004, %v1003
    %v1018 = vpack.c.b16 %v1006, %v1005
    %v1019 = vpack.c.b16 %v1008, %v1007
    %v1020 = vpack.c.b16 %v1010, %v1009
    %v1021 = vpack.c.b16 %v1012, %v1011
    %v1022 = vpack.c.b16 %v1014, %v1013
    %v1047 = vunpack.c.l.b16 %v790
    %v1048 = vunpack.c.l.b16 %v791
    %v1049 = vunpack.c.l.b16 %v792
    %v1050 = vunpack.c.l.b16 %v793
    %v1051 = vunpack.c.l.b16 %v794
    %v1052 = vunpack.c.l.b16 %v795
    %v1053 = vunpack.c.l.b16 %v796
    %v1054 = vunpack.c.l.b16 %v797
    %v1055 = vunpack.c.l.b16 %v798
    %v1056 = vunpack.c.l.b16 %v799
    %v1057 = vunpack.c.l.b16 %v800
    %v1058 = vunpack.c.l.b16 %v801
    %v1059 = vunpack.c.l.b16 %v802
    %v1060 = vunpack.c.l.b16 %v803
    %v1061 = vunpack.c.l.b16 %v804
    %v1062 = vunpack.c.l.b16 %v805
    %v1063 = vpack.c.b16 %v1048, %v1047
    %v1064 = vpack.c.b16 %v1050, %v1049
    %v1065 = vpack.c.b16 %v1052, %v1051
    %v1066 = vpack.c.b16 %v1054, %v1053
    %v1067 = vpack.c.b16 %v1056, %v1055
    %v1068 = vpack.c.b16 %v1058, %v1057
    %v1069 = vpack.c.b16 %v1060, %v1059
    %v1070 = vpack.c.b16 %v1062, %v1061
    %1079 = vmatpush.bf16.xpose.msra.mxu0 %v1070
    %1080 = vmatpush.bf16.xpose.msra.mxu0 %v1069
    %1081 = vmatpush.bf16.xpose.msra.mxu0 %v1068
    %1082 = vmatpush.bf16.xpose.msra.mxu0 %v1067
    %1083 = vmatpush.bf16.xpose.msra.mxu0 %v1066
    %1084 = vmatpush.bf16.xpose.msra.mxu0 %v1065
    %1085 = vmatpush.bf16.xpose.msra.mxu0 %v1064
    %1086 = vmatpush.bf16.xpose.msra.mxu0 %v1063
    %1087 = vmatmul.bf16.gmra.mxu0 %v1015
    %v1088 = vpop.f32.mrf.mxu0
    %v1089 = vadd.f32 0.0, %v1088
    %v1090 = vpop.f32.mrf.mxu0
    %v1091 = vadd.f32 0.0, %v1090
    %1092 = vmatmul.bf16.gmra.mxu0 %v1016
    %v1093 = vpop.f32.mrf.mxu0
    %v1094 = vadd.f32 0.0, %v1093
    %v1095 = vpop.f32.mrf.mxu0
    %v1096 = vadd.f32 0.0, %v1095
    %1097 = vmatmul.bf16.gmra.mxu0 %v1017
    %v1098 = vpop.f32.mrf.mxu0
    %v1099 = vadd.f32 0.0, %v1098
    %v1100 = vpop.f32.mrf.mxu0
    %v1101 = vadd.f32 0.0, %v1100
    %1102 = vmatmul.bf16.gmra.mxu0 %v1018
    %v1103 = vpop.f32.mrf.mxu0
    %v1104 = vadd.f32 0.0, %v1103
    %v1105 = vpop.f32.mrf.mxu0
    %v1106 = vadd.f32 0.0, %v1105
    %1107 = vmatmul.bf16.gmra.mxu0 %v1019
    %v1108 = vpop.f32.mrf.mxu0
    %v1109 = vadd.f32 0.0, %v1108
    %v1110 = vpop.f32.mrf.mxu0
    %v1111 = vadd.f32 0.0, %v1110
    %1112 = vmatmul.bf16.gmra.mxu0 %v1020
    %v1113 = vpop.f32.mrf.mxu0
    %v1114 = vadd.f32 0.0, %v1113
    %v1115 = vpop.f32.mrf.mxu0
    %v1116 = vadd.f32 0.0, %v1115
    %1117 = vmatmul.bf16.gmra.mxu0 %v1021
    %v1118 = vpop.f32.mrf.mxu0
    %v1119 = vadd.f32 0.0, %v1118
    %v1120 = vpop.f32.mrf.mxu0
    %v1121 = vadd.f32 0.0, %v1120
    %1122 = vmatmul.bf16.gmra.mxu0 %v1022
    %v1123 = vpop.f32.mrf.mxu0
    %v1124 = vadd.f32 0.0, %v1123
    %v1125 = vpop.f32.mrf.mxu0
    %v1126 = vadd.f32 0.0, %v1125
    %1127 = vdwg.mxu0
    %1128 = vmax.xlane.f32.xlu0 %v944
    %v1129 = vpop.xlane.xlu0 %1128
    %1130 = vmax.xlane.f32.xlu0 %v946
    %v1131 = vpop.xlane.xlu0 %1130
    %1132 = vmax.xlane.f32.xlu0 %v949
    %v1133 = vpop.xlane.xlu0 %1132
    %1134 = vmax.xlane.f32.xlu0 %v951
    %v1135 = vpop.xlane.xlu0 %1134
    %1136 = vmax.xlane.f32.xlu0 %v954
    %v1137 = vpop.xlane.xlu0 %1136
    %1138 = vmax.xlane.f32.xlu0 %v956
    %v1139 = vpop.xlane.xlu0 %1138
    %1140 = vmax.xlane.f32.xlu0 %v959
    %v1141 = vpop.xlane.xlu0 %1140
    %1142 = vmax.xlane.f32.xlu0 %v961
    %v1143 = vpop.xlane.xlu0 %1142
    %1144 = vmax.xlane.f32.xlu0 %v964
    %v1145 = vpop.xlane.xlu0 %1144
    %1146 = vmax.xlane.f32.xlu0 %v966
    %v1147 = vpop.xlane.xlu0 %1146
    %1148 = vmax.xlane.f32.xlu0 %v969
    %v1149 = vpop.xlane.xlu0 %1148
    %1150 = vmax.xlane.f32.xlu0 %v971
    %v1151 = vpop.xlane.xlu0 %1150
    %1152 = vmax.xlane.f32.xlu0 %v974
    %v1153 = vpop.xlane.xlu0 %1152
    %1154 = vmax.xlane.f32.xlu0 %v976
    %v1155 = vpop.xlane.xlu0 %1154
    %1156 = vmax.xlane.f32.xlu0 %v979
    %v1157 = vpop.xlane.xlu0 %1156
    %1158 = vmax.xlane.f32.xlu0 %v981
    %v1159 = vpop.xlane.xlu0 %1158
    %1160 = vmax.xlane.f32.xlu0 %v1089
    %v1161 = vpop.xlane.xlu0 %1160
    %1162 = vmax.xlane.f32.xlu0 %v1091
    %v1163 = vpop.xlane.xlu0 %1162
    %1164 = vmax.xlane.f32.xlu0 %v1094
    %v1165 = vpop.xlane.xlu0 %1164
    %1166 = vmax.xlane.f32.xlu0 %v1096
    %v1167 = vpop.xlane.xlu0 %1166
    %1168 = vmax.xlane.f32.xlu0 %v1099
    %v1169 = vpop.xlane.xlu0 %1168
    %1170 = vmax.xlane.f32.xlu0 %v1101
    %v1171 = vpop.xlane.xlu0 %1170
    %1172 = vmax.xlane.f32.xlu0 %v1104
    %v1173 = vpop.xlane.xlu0 %1172
    %1174 = vmax.xlane.f32.xlu0 %v1106
    %v1175 = vpop.xlane.xlu0 %1174
    %1176 = vmax.xlane.f32.xlu0 %v1109
    %v1177 = vpop.xlane.xlu0 %1176
    %1178 = vmax.xlane.f32.xlu0 %v1111
    %v1179 = vpop.xlane.xlu0 %1178
    %1180 = vmax.xlane.f32.xlu0 %v1114
    %v1181 = vpop.xlane.xlu0 %1180
    %1182 = vmax.xlane.f32.xlu0 %v1116
    %v1183 = vpop.xlane.xlu0 %1182
    %1184 = vmax.xlane.f32.xlu0 %v1119
    %v1185 = vpop.xlane.xlu0 %1184
    %1186 = vmax.xlane.f32.xlu0 %v1121
    %v1187 = vpop.xlane.xlu0 %1186
    %1188 = vmax.xlane.f32.xlu0 %v1124
    %v1189 = vpop.xlane.xlu0 %1188
    %1190 = vmax.xlane.f32.xlu0 %v1126
    %v1191 = vpop.xlane.xlu0 %1190
    %v1192 = vsub.f32 %v944, %v1129
    %v1193 = vsub.f32 %v946, %v1131
    %v1194 = vsub.f32 %v949, %v1133
    %v1195 = vsub.f32 %v951, %v1135
    %v1196 = vsub.f32 %v954, %v1137
    %v1197 = vsub.f32 %v956, %v1139
    %v1198 = vsub.f32 %v959, %v1141
    %v1199 = vsub.f32 %v961, %v1143
    %v1200 = vsub.f32 %v964, %v1145
    %v1201 = vsub.f32 %v966, %v1147
    %v1202 = vsub.f32 %v969, %v1149
    %v1203 = vsub.f32 %v971, %v1151
    %v1204 = vsub.f32 %v974, %v1153
    %v1205 = vsub.f32 %v976, %v1155
    %v1206 = vsub.f32 %v979, %v1157
    %v1207 = vsub.f32 %v981, %v1159
    %v1208 = vsub.f32 %v1089, %v1161
    %v1209 = vsub.f32 %v1091, %v1163
    %v1210 = vsub.f32 %v1094, %v1165
    %v1211 = vsub.f32 %v1096, %v1167
    %v1212 = vsub.f32 %v1099, %v1169
    %v1213 = vsub.f32 %v1101, %v1171
    %v1214 = vsub.f32 %v1104, %v1173
    %v1215 = vsub.f32 %v1106, %v1175
    %v1216 = vsub.f32 %v1109, %v1177
    %v1217 = vsub.f32 %v1111, %v1179
    %v1218 = vsub.f32 %v1114, %v1181
    %v1219 = vsub.f32 %v1116, %v1183
    %v1220 = vsub.f32 %v1119, %v1185
    %v1221 = vsub.f32 %v1121, %v1187
    %v1222 = vsub.f32 %v1124, %v1189
    %v1223 = vsub.f32 %v1126, %v1191
    %v1224 = vmul.f32 %v1192, 1.442695
    %v1225 = vpow.pop %v1224
    %v1226 = vmul.f32 %v1193, 1.442695
    %v1227 = vpow.pop %v1226
    %v1228 = vmul.f32 %v1194, 1.442695
    %v1229 = vpow.pop %v1228
    %v1230 = vmul.f32 %v1195, 1.442695
    %v1231 = vpow.pop %v1230
    %v1232 = vmul.f32 %v1196, 1.442695
    %v1233 = vpow.pop %v1232
    %v1234 = vmul.f32 %v1197, 1.442695
    %v1235 = vpow.pop %v1234
    %v1236 = vmul.f32 %v1198, 1.442695
    %v1237 = vpow.pop %v1236
    %v1238 = vmul.f32 %v1199, 1.442695
    %v1239 = vpow.pop %v1238
    %v1240 = vmul.f32 %v1200, 1.442695
    %v1241 = vpow.pop %v1240
    %v1242 = vmul.f32 %v1201, 1.442695
    %v1243 = vpow.pop %v1242
    %v1244 = vmul.f32 %v1202, 1.442695
    %v1245 = vpow.pop %v1244
    %v1246 = vmul.f32 %v1203, 1.442695
    %v1247 = vpow.pop %v1246
    %v1248 = vmul.f32 %v1204, 1.442695
    %v1249 = vpow.pop %v1248
    %v1250 = vmul.f32 %v1205, 1.442695
    %v1251 = vpow.pop %v1250
    %v1252 = vmul.f32 %v1206, 1.442695
    %v1253 = vpow.pop %v1252
    %v1254 = vmul.f32 %v1207, 1.442695
    %v1255 = vpow.pop %v1254
    %v1256 = vmul.f32 %v1208, 1.442695
    %v1257 = vpow.pop %v1256
    %v1258 = vmul.f32 %v1209, 1.442695
    %v1259 = vpow.pop %v1258
    %v1260 = vmul.f32 %v1210, 1.442695
    %v1261 = vpow.pop %v1260
    %v1262 = vmul.f32 %v1211, 1.442695
    %v1263 = vpow.pop %v1262
    %v1264 = vmul.f32 %v1212, 1.442695
    %v1265 = vpow.pop %v1264
    %v1266 = vmul.f32 %v1213, 1.442695
    %v1267 = vpow.pop %v1266
    %v1268 = vmul.f32 %v1214, 1.442695
    %v1269 = vpow.pop %v1268
    %v1270 = vmul.f32 %v1215, 1.442695
    %v1271 = vpow.pop %v1270
    %v1272 = vmul.f32 %v1216, 1.442695
    %v1273 = vpow.pop %v1272
    %v1274 = vmul.f32 %v1217, 1.442695
    %v1275 = vpow.pop %v1274
    %v1276 = vmul.f32 %v1218, 1.442695
    %v1277 = vpow.pop %v1276
    %v1278 = vmul.f32 %v1219, 1.442695
    %v1279 = vpow.pop %v1278
    %v1280 = vmul.f32 %v1220, 1.442695
    %v1281 = vpow.pop %v1280
    %v1282 = vmul.f32 %v1221, 1.442695
    %v1283 = vpow.pop %v1282
    %v1284 = vmul.f32 %v1222, 1.442695
    %v1285 = vpow.pop %v1284
    %v1286 = vmul.f32 %v1223, 1.442695
    %v1287 = vpow.pop %v1286
    %1288 = vadd.xlane.f32.xlu0 %v1225
    %v1289 = vpop.xlane.xlu0 %1288
    %1290 = vadd.xlane.f32.xlu0 %v1227
    %v1291 = vpop.xlane.xlu0 %1290
    %1292 = vadd.xlane.f32.xlu0 %v1229
    %v1293 = vpop.xlane.xlu0 %1292
    %1294 = vadd.xlane.f32.xlu0 %v1231
    %v1295 = vpop.xlane.xlu0 %1294
    %1296 = vadd.xlane.f32.xlu0 %v1233
    %v1297 = vpop.xlane.xlu0 %1296
    %1298 = vadd.xlane.f32.xlu0 %v1235
    %v1299 = vpop.xlane.xlu0 %1298
    %1300 = vadd.xlane.f32.xlu0 %v1237
    %v1301 = vpop.xlane.xlu0 %1300
    %1302 = vadd.xlane.f32.xlu0 %v1239
    %v1303 = vpop.xlane.xlu0 %1302
    %1304 = vadd.xlane.f32.xlu0 %v1241
    %v1305 = vpop.xlane.xlu0 %1304
    %1306 = vadd.xlane.f32.xlu0 %v1243
    %v1307 = vpop.xlane.xlu0 %1306
    %1308 = vadd.xlane.f32.xlu0 %v1245
    %v1309 = vpop.xlane.xlu0 %1308
    %1310 = vadd.xlane.f32.xlu0 %v1247
    %v1311 = vpop.xlane.xlu0 %1310
    %1312 = vadd.xlane.f32.xlu0 %v1249
    %v1313 = vpop.xlane.xlu0 %1312
    %1314 = vadd.xlane.f32.xlu0 %v1251
    %v1315 = vpop.xlane.xlu0 %1314
    %1316 = vadd.xlane.f32.xlu0 %v1253
    %v1317 = vpop.xlane.xlu0 %1316
    %1318 = vadd.xlane.f32.xlu0 %v1255
    %v1319 = vpop.xlane.xlu0 %1318
    %1320 = vadd.xlane.f32.xlu0 %v1257
    %v1321 = vpop.xlane.xlu0 %1320
    %1322 = vadd.xlane.f32.xlu0 %v1259
    %v1323 = vpop.xlane.xlu0 %1322
    %1324 = vadd.xlane.f32.xlu0 %v1261
    %v1325 = vpop.xlane.xlu0 %1324
    %1326 = vadd.xlane.f32.xlu0 %v1263
    %v1327 = vpop.xlane.xlu0 %1326
    %1328 = vadd.xlane.f32.xlu0 %v1265
    %v1329 = vpop.xlane.xlu0 %1328
    %1330 = vadd.xlane.f32.xlu0 %v1267
    %v1331 = vpop.xlane.xlu0 %1330
    %1332 = vadd.xlane.f32.xlu0 %v1269
    %v1333 = vpop.xlane.xlu0 %1332
    %1334 = vadd.xlane.f32.xlu0 %v1271
    %v1335 = vpop.xlane.xlu0 %1334
    %1336 = vadd.xlane.f32.xlu0 %v1273
    %v1337 = vpop.xlane.xlu0 %1336
    %1338 = vadd.xlane.f32.xlu0 %v1275
    %v1339 = vpop.xlane.xlu0 %1338
    %1340 = vadd.xlane.f32.xlu0 %v1277
    %v1341 = vpop.xlane.xlu0 %1340
    %1342 = vadd.xlane.f32.xlu0 %v1279
    %v1343 = vpop.xlane.xlu0 %1342
    %1344 = vadd.xlane.f32.xlu0 %v1281
    %v1345 = vpop.xlane.xlu0 %1344
    %1346 = vadd.xlane.f32.xlu0 %v1283
    %v1347 = vpop.xlane.xlu0 %1346
    %1348 = vadd.xlane.f32.xlu0 %v1285
    %v1349 = vpop.xlane.xlu0 %1348
    %1350 = vadd.xlane.f32.xlu0 %v1287
    %v1351 = vpop.xlane.xlu0 %1350
    %v1352 = vrcp.pop %v1289
    %v1353 = vrcp.pop %v1291
    %v1354 = vrcp.pop %v1293
    %v1355 = vrcp.pop %v1295
    %v1356 = vrcp.pop %v1297
    %v1357 = vrcp.pop %v1299
    %v1358 = vrcp.pop %v1301
    %v1359 = vrcp.pop %v1303
    %v1360 = vrcp.pop %v1305
    %v1361 = vrcp.pop %v1307
    %v1362 = vrcp.pop %v1309
    %v1363 = vrcp.pop %v1311
    %v1364 = vrcp.pop %v1313
    %v1365 = vrcp.pop %v1315
    %v1366 = vrcp.pop %v1317
    %v1367 = vrcp.pop %v1319
    %v1368 = vrcp.pop %v1321
    %v1369 = vrcp.pop %v1323
    %v1370 = vrcp.pop %v1325
    %v1371 = vrcp.pop %v1327
    %v1372 = vrcp.pop %v1329
    %v1373 = vrcp.pop %v1331
    %v1374 = vrcp.pop %v1333
    %v1375 = vrcp.pop %v1335
    %v1376 = vrcp.pop %v1337
    %v1377 = vrcp.pop %v1339
    %v1378 = vrcp.pop %v1341
    %v1379 = vrcp.pop %v1343
    %v1380 = vrcp.pop %v1345
    %v1381 = vrcp.pop %v1347
    %v1382 = vrcp.pop %v1349
    %v1383 = vrcp.pop %v1351
    %v1384 = vpack.c.bf16 %v1225, %v1225
    %v1385 = vpack.c.bf16 %v1227, %v1227
    %v1386 = vpack.c.bf16 %v1229, %v1229
    %v1387 = vpack.c.bf16 %v1231, %v1231
    %v1388 = vpack.c.bf16 %v1233, %v1233
    %v1389 = vpack.c.bf16 %v1235, %v1235
    %v1390 = vpack.c.bf16 %v1237, %v1237
    %v1391 = vpack.c.bf16 %v1239, %v1239
    %v1392 = vpack.c.bf16 %v1241, %v1241
    %v1393 = vpack.c.bf16 %v1243, %v1243
    %v1394 = vpack.c.bf16 %v1245, %v1245
    %v1395 = vpack.c.bf16 %v1247, %v1247
    %v1396 = vpack.c.bf16 %v1249, %v1249
    %v1397 = vpack.c.bf16 %v1251, %v1251
    %v1398 = vpack.c.bf16 %v1253, %v1253
    %v1399 = vpack.c.bf16 %v1255, %v1255
    %v1400 = vpack.c.bf16 %v1257, %v1257
    %v1401 = vpack.c.bf16 %v1259, %v1259
    %v1402 = vpack.c.bf16 %v1261, %v1261
    %v1403 = vpack.c.bf16 %v1263, %v1263
    %v1404 = vpack.c.bf16 %v1265, %v1265
    %v1405 = vpack.c.bf16 %v1267, %v1267
    %v1406 = vpack.c.bf16 %v1269, %v1269
    %v1407 = vpack.c.bf16 %v1271, %v1271
    %v1408 = vpack.c.bf16 %v1273, %v1273
    %v1409 = vpack.c.bf16 %v1275, %v1275
    %v1410 = vpack.c.bf16 %v1277, %v1277
    %v1411 = vpack.c.bf16 %v1279, %v1279
    %v1412 = vpack.c.bf16 %v1281, %v1281
    %v1413 = vpack.c.bf16 %v1283, %v1283
    %v1414 = vpack.c.bf16 %v1285, %v1285
    %v1415 = vpack.c.bf16 %v1287, %v1287
    %v1432 = vunpack.c.l.b16 %v1384
    %v1433 = vunpack.c.l.b16 %v1385
    %v1434 = vunpack.c.l.b16 %v1386
    %v1435 = vunpack.c.l.b16 %v1387
    %v1436 = vunpack.c.l.b16 %v1388
    %v1437 = vunpack.c.l.b16 %v1389
    %v1438 = vunpack.c.l.b16 %v1390
    %v1439 = vunpack.c.l.b16 %v1391
    %v1440 = vunpack.c.l.b16 %v1392
    %v1441 = vunpack.c.l.b16 %v1393
    %v1442 = vunpack.c.l.b16 %v1394
    %v1443 = vunpack.c.l.b16 %v1395
    %v1444 = vunpack.c.l.b16 %v1396
    %v1445 = vunpack.c.l.b16 %v1397
    %v1446 = vunpack.c.l.b16 %v1398
    %v1447 = vunpack.c.l.b16 %v1399
    %v1448 = vpack.c.b16 %v1433, %v1432
    %v1449 = vpack.c.b16 %v1435, %v1434
    %v1450 = vpack.c.b16 %v1437, %v1436
    %v1451 = vpack.c.b16 %v1439, %v1438
    %v1452 = vpack.c.b16 %v1441, %v1440
    %v1453 = vpack.c.b16 %v1443, %v1442
    %v1454 = vpack.c.b16 %v1445, %v1444
    %v1455 = vpack.c.b16 %v1447, %v1446
    %v1480 = vunpack.c.l.b16 %v806
    %v1481 = vunpack.c.l.b16 %v807
    %v1482 = vunpack.c.l.b16 %v808
    %v1483 = vunpack.c.l.b16 %v809
    %v1484 = vunpack.c.l.b16 %v810
    %v1485 = vunpack.c.l.b16 %v811
    %v1486 = vunpack.c.l.b16 %v812
    %v1487 = vunpack.c.l.b16 %v813
    %v1488 = vunpack.c.l.b16 %v814
    %v1489 = vunpack.c.l.b16 %v815
    %v1490 = vunpack.c.l.b16 %v816
    %v1491 = vunpack.c.l.b16 %v817
    %v1492 = vunpack.c.l.b16 %v818
    %v1493 = vunpack.c.l.b16 %v819
    %v1494 = vunpack.c.l.b16 %v820
    %v1495 = vunpack.c.l.b16 %v821
    %v1496 = vpack.c.b16 %v1481, %v1480
    %v1497 = vpack.c.b16 %v1483, %v1482
    %v1498 = vpack.c.b16 %v1485, %v1484
    %v1499 = vpack.c.b16 %v1487, %v1486
    %v1500 = vpack.c.b16 %v1489, %v1488
    %v1501 = vpack.c.b16 %v1491, %v1490
    %v1502 = vpack.c.b16 %v1493, %v1492
    %v1503 = vpack.c.b16 %v1495, %v1494
    %1512 = vmatpush.bf16.msra.mxu0 %v1503
    %1513 = vmatpush.bf16.msra.mxu0 %v1502
    %1514 = vmatpush.bf16.msra.mxu0 %v1501
    %1515 = vmatpush.bf16.msra.mxu0 %v1500
    %1516 = vmatpush.bf16.msra.mxu0 %v1499
    %1517 = vmatpush.bf16.msra.mxu0 %v1498
    %1518 = vmatpush.bf16.msra.mxu0 %v1497
    %1519 = vmatpush.bf16.msra.mxu0 %v1496
    %1520 = vmatmul.bf16.gmra.mxu0 %v1448
    %v1521 = vpop.f32.mrf.mxu0
    %v1522 = vadd.f32 0.0, %v1521
    %v1523 = vpop.f32.mrf.mxu0
    %v1524 = vadd.f32 0.0, %v1523
    %1525 = vmatmul.bf16.gmra.mxu0 %v1449
    %v1526 = vpop.f32.mrf.mxu0
    %v1527 = vadd.f32 0.0, %v1526
    %v1528 = vpop.f32.mrf.mxu0
    %v1529 = vadd.f32 0.0, %v1528
    %1530 = vmatmul.bf16.gmra.mxu0 %v1450
    %v1531 = vpop.f32.mrf.mxu0
    %v1532 = vadd.f32 0.0, %v1531
    %v1533 = vpop.f32.mrf.mxu0
    %v1534 = vadd.f32 0.0, %v1533
    %1535 = vmatmul.bf16.gmra.mxu0 %v1451
    %v1536 = vpop.f32.mrf.mxu0
    %v1537 = vadd.f32 0.0, %v1536
    %v1538 = vpop.f32.mrf.mxu0
    %v1539 = vadd.f32 0.0, %v1538
    %1540 = vmatmul.bf16.gmra.mxu0 %v1452
    %v1541 = vpop.f32.mrf.mxu0
    %v1542 = vadd.f32 0.0, %v1541
    %v1543 = vpop.f32.mrf.mxu0
    %v1544 = vadd.f32 0.0, %v1543
    %1545 = vmatmul.bf16.gmra.mxu0 %v1453
    %v1546 = vpop.f32.mrf.mxu0
    %v1547 = vadd.f32 0.0, %v1546
    %v1548 = vpop.f32.mrf.mxu0
    %v1549 = vadd.f32 0.0, %v1548
    %1550 = vmatmul.bf16.gmra.mxu0 %v1454
    %v1551 = vpop.f32.mrf.mxu0
    %v1552 = vadd.f32 0.0, %v1551
    %v1553 = vpop.f32.mrf.mxu0
    %v1554 = vadd.f32 0.0, %v1553
    %1555 = vmatmul.bf16.gmra.mxu0 %v1455
    %v1556 = vpop.f32.mrf.mxu0
    %v1557 = vadd.f32 0.0, %v1556
    %v1558 = vpop.f32.mrf.mxu0
    %v1559 = vadd.f32 0.0, %v1558
    %1560 = vdwg.mxu0
    %v1577 = vunpack.c.l.b16 %v1400
    %v1578 = vunpack.c.l.b16 %v1401
    %v1579 = vunpack.c.l.b16 %v1402
    %v1580 = vunpack.c.l.b16 %v1403
    %v1581 = vunpack.c.l.b16 %v1404
    %v1582 = vunpack.c.l.b16 %v1405
    %v1583 = vunpack.c.l.b16 %v1406
    %v1584 = vunpack.c.l.b16 %v1407
    %v1585 = vunpack.c.l.b16 %v1408
    %v1586 = vunpack.c.l.b16 %v1409
    %v1587 = vunpack.c.l.b16 %v1410
    %v1588 = vunpack.c.l.b16 %v1411
    %v1589 = vunpack.c.l.b16 %v1412
    %v1590 = vunpack.c.l.b16 %v1413
    %v1591 = vunpack.c.l.b16 %v1414
    %v1592 = vunpack.c.l.b16 %v1415
    %v1593 = vpack.c.b16 %v1578, %v1577
    %v1594 = vpack.c.b16 %v1580, %v1579
    %v1595 = vpack.c.b16 %v1582, %v1581
    %v1596 = vpack.c.b16 %v1584, %v1583
    %v1597 = vpack.c.b16 %v1586, %v1585
    %v1598 = vpack.c.b16 %v1588, %v1587
    %v1599 = vpack.c.b16 %v1590, %v1589
    %v1600 = vpack.c.b16 %v1592, %v1591
    %v1625 = vunpack.c.l.b16 %v822
    %v1626 = vunpack.c.l.b16 %v823
    %v1627 = vunpack.c.l.b16 %v824
    %v1628 = vunpack.c.l.b16 %v825
    %v1629 = vunpack.c.l.b16 %v826
    %v1630 = vunpack.c.l.b16 %v827
    %v1631 = vunpack.c.l.b16 %v828
    %v1632 = vunpack.c.l.b16 %v829
    %v1633 = vunpack.c.l.b16 %v830
    %v1634 = vunpack.c.l.b16 %v831
    %v1635 = vunpack.c.l.b16 %v832
    %v1636 = vunpack.c.l.b16 %v833
    %v1637 = vunpack.c.l.b16 %v834
    %v1638 = vunpack.c.l.b16 %v835
    %v1639 = vunpack.c.l.b16 %v836
    %v1640 = vunpack.c.l.b16 %v837
    %v1641 = vpack.c.b16 %v1626, %v1625
    %v1642 = vpack.c.b16 %v1628, %v1627
    %v1643 = vpack.c.b16 %v1630, %v1629
    %v1644 = vpack.c.b16 %v1632, %v1631
    %v1645 = vpack.c.b16 %v1634, %v1633
    %v1646 = vpack.c.b16 %v1636, %v1635
    %v1647 = vpack.c.b16 %v1638, %v1637
    %v1648 = vpack.c.b16 %v1640, %v1639
    %1657 = vmatpush.bf16.msra.mxu0 %v1648
    %1658 = vmatpush.bf16.msra.mxu0 %v1647
    %1659 = vmatpush.bf16.msra.mxu0 %v1646
    %1660 = vmatpush.bf16.msra.mxu0 %v1645
    %1661 = vmatpush.bf16.msra.mxu0 %v1644
    %1662 = vmatpush.bf16.msra.mxu0 %v1643
    %1663 = vmatpush.bf16.msra.mxu0 %v1642
    %1664 = vmatpush.bf16.msra.mxu0 %v1641
    %1665 = vmatmul.bf16.gmra.mxu0 %v1593
    %v1666 = vpop.f32.mrf.mxu0
    %v1667 = vadd.f32 0.0, %v1666
    %v1668 = vpop.f32.mrf.mxu0
    %v1669 = vadd.f32 0.0, %v1668
    %1670 = vmatmul.bf16.gmra.mxu0 %v1594
    %v1671 = vpop.f32.mrf.mxu0
    %v1672 = vadd.f32 0.0, %v1671
    %v1673 = vpop.f32.mrf.mxu0
    %v1674 = vadd.f32 0.0, %v1673
    %1675 = vmatmul.bf16.gmra.mxu0 %v1595
    %v1676 = vpop.f32.mrf.mxu0
    %v1677 = vadd.f32 0.0, %v1676
    %v1678 = vpop.f32.mrf.mxu0
    %v1679 = vadd.f32 0.0, %v1678
    %1680 = vmatmul.bf16.gmra.mxu0 %v1596
    %v1681 = vpop.f32.mrf.mxu0
    %v1682 = vadd.f32 0.0, %v1681
    %v1683 = vpop.f32.mrf.mxu0
    %v1684 = vadd.f32 0.0, %v1683
    %1685 = vmatmul.bf16.gmra.mxu0 %v1597
    %v1686 = vpop.f32.mrf.mxu0
    %v1687 = vadd.f32 0.0, %v1686
    %v1688 = vpop.f32.mrf.mxu0
    %v1689 = vadd.f32 0.0, %v1688
    %1690 = vmatmul.bf16.gmra.mxu0 %v1598
    %v1691 = vpop.f32.mrf.mxu0
    %v1692 = vadd.f32 0.0, %v1691
    %v1693 = vpop.f32.mrf.mxu0
    %v1694 = vadd.f32 0.0, %v1693
    %1695 = vmatmul.bf16.gmra.mxu0 %v1599
    %v1696 = vpop.f32.mrf.mxu0
    %v1697 = vadd.f32 0.0, %v1696
    %v1698 = vpop.f32.mrf.mxu0
    %v1699 = vadd.f32 0.0, %v1698
    %1700 = vmatmul.bf16.gmra.mxu0 %v1600
    %v1701 = vpop.f32.mrf.mxu0
    %v1702 = vadd.f32 0.0, %v1701
    %v1703 = vpop.f32.mrf.mxu0
    %v1704 = vadd.f32 0.0, %v1703
    %1705 = vdwg.mxu0
    %v1706 = vmul.f32 %v1522, %v1352
    %v1707 = vmul.f32 %v1524, %v1353
    %v1708 = vmul.f32 %v1527, %v1354
    %v1709 = vmul.f32 %v1529, %v1355
    %v1710 = vmul.f32 %v1532, %v1356
    %v1711 = vmul.f32 %v1534, %v1357
    %v1712 = vmul.f32 %v1537, %v1358
    %v1713 = vmul.f32 %v1539, %v1359
    %v1714 = vmul.f32 %v1542, %v1360
    %v1715 = vmul.f32 %v1544, %v1361
    %v1716 = vmul.f32 %v1547, %v1362
    %v1717 = vmul.f32 %v1549, %v1363
    %v1718 = vmul.f32 %v1552, %v1364
    %v1719 = vmul.f32 %v1554, %v1365
    %v1720 = vmul.f32 %v1557, %v1366
    %v1721 = vmul.f32 %v1559, %v1367
    %v1722 = vmul.f32 %v1667, %v1368
    %v1723 = vmul.f32 %v1669, %v1369
    %v1724 = vmul.f32 %v1672, %v1370
    %v1725 = vmul.f32 %v1674, %v1371
    %v1726 = vmul.f32 %v1677, %v1372
    %v1727 = vmul.f32 %v1679, %v1373
    %v1728 = vmul.f32 %v1682, %v1374
    %v1729 = vmul.f32 %v1684, %v1375
    %v1730 = vmul.f32 %v1687, %v1376
    %v1731 = vmul.f32 %v1689, %v1377
    %v1732 = vmul.f32 %v1692, %v1378
    %v1733 = vmul.f32 %v1694, %v1379
    %v1734 = vmul.f32 %v1697, %v1380
    %v1735 = vmul.f32 %v1699, %v1381
    %v1736 = vmul.f32 %v1702, %v1382
    %v1737 = vmul.f32 %v1704, %v1383
    %1738 = vst [vmem:[#allocation13] sm:$0xff] %v1706
    %1739 = vst [vmem:[#allocation13 + $0x8] sm:$0xff] %v1707
    %1740 = vst [vmem:[#allocation13 + $0x10] sm:$0xff] %v1708
    %1741 = vst [vmem:[#allocation13 + $0x18] sm:$0xff] %v1709
    %1742 = vst [vmem:[#allocation13 + $0x20] sm:$0xff] %v1710
    %1743 = vst [vmem:[#allocation13 + $0x28] sm:$0xff] %v1711
    %1744 = vst [vmem:[#allocation13 + $0x30] sm:$0xff] %v1712
    %1745 = vst [vmem:[#allocation13 + $0x38] sm:$0xff] %v1713
    %1746 = vst [vmem:[#allocation13 + $0x40] sm:$0xff] %v1714
    %1747 = vst [vmem:[#allocation13 + $0x48] sm:$0xff] %v1715
    %1748 = vst [vmem:[#allocation13 + $0x50] sm:$0xff] %v1716
    %1749 = vst [vmem:[#allocation13 + $0x58] sm:$0xff] %v1717
    %1750 = vst [vmem:[#allocation13 + $0x60] sm:$0xff] %v1718
    %1751 = vst [vmem:[#allocation13 + $0x68] sm:$0xff] %v1719
    %1752 = vst [vmem:[#allocation13 + $0x70] sm:$0xff] %v1720
    %1753 = vst [vmem:[#allocation13 + $0x78] sm:$0xff] %v1721
    %1754 = vst [vmem:[#allocation13 + $0x80] sm:$0xff] %v1722
    %1755 = vst [vmem:[#allocation13 + $0x88] sm:$0xff] %v1723
    %1756 = vst [vmem:[#allocation13 + $0x90] sm:$0xff] %v1724
    %1757 = vst [vmem:[#allocation13 + $0x98] sm:$0xff] %v1725
    %1758 = vst [vmem:[#allocation13 + $0xa0] sm:$0xff] %v1726
    %1759 = vst [vmem:[#allocation13 + $0xa8] sm:$0xff] %v1727
    %1760 = vst [vmem:[#allocation13 + $0xb0] sm:$0xff] %v1728
    %1761 = vst [vmem:[#allocation13 + $0xb8] sm:$0xff] %v1729
    %1762 = vst [vmem:[#allocation13 + $0xc0] sm:$0xff] %v1730
    %1763 = vst [vmem:[#allocation13 + $0xc8] sm:$0xff] %v1731
    %1764 = vst [vmem:[#allocation13 + $0xd0] sm:$0xff] %v1732
    %1765 = vst [vmem:[#allocation13 + $0xd8] sm:$0xff] %v1733
    %1766 = vst [vmem:[#allocation13 + $0xe0] sm:$0xff] %v1734
    %1767 = vst [vmem:[#allocation13 + $0xe8] sm:$0xff] %v1735
    %1768 = vst [vmem:[#allocation13 + $0xf0] sm:$0xff] %v1736
    %1769 = vst [vmem:[#allocation13 + $0xf8] sm:$0xff] %v1737
    // Predicated region
    $region62: #{tpu_custom_call.1} parent=1 // pred_check
      _
    $region63: #{tpu_custom_call.1} parent=1 // pred_check_branch
      %1771 = sbr.rel (0) target = $region65
    $region64: #{tpu_custom_call.1} parent=1 // pred_region
      %1773 = vsyncadd [#allocation4], 0
      %s1774 = sshll.u32 [#allocation13], 4
      %s1775 = int_to_ptr.vmem [resolvable:$true] %s1774
      %s1776 = sshll.u32 %s9, 4
      %s1777 = int_to_ptr.hbm [resolvable:$true] %s1776
      %1782 = dma.vmem_to_hbm [thread:$0]  %s1775, 4096, %s1777, [#allocation4], 128, 128, 8
    $region65: #{tpu_custom_call.1} parent=1 // pred_fallthru
      _
    // Predicated region
    $region66: #{tpu_custom_call.1} parent=1 // pred_check
      _
    $region67: #{tpu_custom_call.1} parent=1 // pred_check_branch
      %1784 = sbr.rel (0) target = $region69
    $region68: #{tpu_custom_call.1} parent=1 // pred_region
      %1786 = dma.done [#allocation4], 4096
    $region69: #{tpu_custom_call.1} parent=1 // pred_fallthru
      _
    %1787 = vsyncpa [#allocation3], 1
    %1788 = vsyncpa [#allocation6], 1
    %1789 = vsyncpa [#allocation9], 1
    %1790 = vsyncpa [#allocation12], 1
    %1791 = vsyncpa [#allocation4], 1

</llo_original>
